<compile_context>
chip_gen: v7x
topology: tpu7x:2x2x1
jax: 0.10.0
libtpu: 0.0.40
codegen_flags: <defaults>
</compile_context>

<pallas_src>
import functools
import inspect
import math

import jax
import jax.numpy as jnp
from jax import lax
from jax.experimental import pallas as pl
from jax.experimental.pallas import tpu as pltpu


def encoder_layer_kernel(
    src_ref, pos_ref,
    wqk_t_ref, bqk_ref, wv_t_ref, bv_ref,
    wo_t_ref, bo_ref,
    w1_t_ref, b1_ref, w2_t_ref, b2_ref,
    ln1w_ref, ln1b_ref, ln2w_ref, ln2b_ref,
    out_ref,
    *, nhead: int,
):
    Bt, S, D = src_ref.shape
    hd = D // nhead
    R = Bt * S

    # Residual path kept in f32; matmul operands cast to bf16 (f32 accumulation).
    x = src_ref[...].reshape(R, D).astype(jnp.float32)
    p = pos_ref[...].reshape(R, D).astype(jnp.float32)
    qk_in = (x + p).astype(jnp.bfloat16)        # q = k = with_pos_embed(src, pos)
    x_bf = x.astype(jnp.bfloat16)               # v input = src

    # Fused Q/K projection (one (R,D)@(D,2D) MXU matmul; 1/sqrt(hd) already folded
    # into the Q half of weights/bias at prepare time) + V projection.
    qk = jnp.dot(qk_in, wqk_t_ref[...], preferred_element_type=jnp.float32) + bqk_ref[...]
    v = jnp.dot(x_bf, wv_t_ref[...], preferred_element_type=jnp.float32) + bv_ref[...]

    q_bf = qk[:, :D].astype(jnp.bfloat16)
    k_bf = qk[:, D:].astype(jnp.bfloat16)
    v_bf = v.astype(jnp.bfloat16)

    # Head-batched attention: assemble (Bt*nhead, S, hd) operands once (static
    # slices + stack, pure value ops -> no masked scratch stores), then run the
    # score and context matmuls as two batched einsums over all (batch, head)
    # pairs.  The score einsum contracts the last axis of both operands, so no
    # transpose is materialized.
    def to_heads(t):
        return jnp.stack(
            [t[b * S:(b + 1) * S, h * hd:(h + 1) * hd]
             for b in range(Bt) for h in range(nhead)], axis=0)

    qh = to_heads(q_bf)                                               # (BH, S, hd)
    kh = to_heads(k_bf)                                               # (BH, S, hd)
    vh = to_heads(v_bf)                                               # (BH, S, hd)

    s = jnp.einsum('bqd,bkd->bqk', qh, kh,
                   preferred_element_type=jnp.float32)                # (BH, S, S) f32
    s = s - jnp.max(s, axis=-1, keepdims=True)
    e = jnp.exp(s)
    inv_den = pl.reciprocal(jnp.sum(e, axis=-1, keepdims=True), approx=True)
    a = (e * inv_den).astype(jnp.bfloat16)
    ctx = jnp.einsum('bqk,bkd->bqd', a, vh,
                     preferred_element_type=jnp.float32)              # (BH, S, hd) f32

    # Reassemble (R, D): lane-concat heads per batch element, then stack batches.
    rows = [jnp.concatenate([ctx[b * nhead + h] for h in range(nhead)], axis=-1)
            for b in range(Bt)]                                       # each (S, D)
    attn = rows[0] if Bt == 1 else jnp.concatenate(rows, axis=0)      # (R, D) f32

    # MHA output projection (no VMEM scratch round trip).
    attn_out = jnp.dot(attn.astype(jnp.bfloat16), wo_t_ref[...],
                       preferred_element_type=jnp.float32) + bo_ref[...]

    # Residual + LayerNorm 1 (dropout1 identity; one-pass variance).
    x1 = x + attn_out
    mu1 = jnp.mean(x1, axis=-1, keepdims=True)
    var1 = jnp.mean(x1 * x1, axis=-1, keepdims=True) - mu1 * mu1
    x1n = (x1 - mu1) * lax.rsqrt(var1 + 1e-5) * ln1w_ref[...] + ln1b_ref[...]

    # Feed-forward: linear1 -> relu -> (dropout) -> linear2.
    h1 = jnp.dot(x1n.astype(jnp.bfloat16), w1_t_ref[...],
                 preferred_element_type=jnp.float32) + b1_ref[...]
    h1 = jnp.maximum(h1, 0.0)
    ff = jnp.dot(h1.astype(jnp.bfloat16), w2_t_ref[...],
                 preferred_element_type=jnp.float32) + b2_ref[...]

    # Residual + LayerNorm 2 (dropout2 identity; one-pass variance).
    x2 = x1n + ff
    mu2 = jnp.mean(x2, axis=-1, keepdims=True)
    var2 = jnp.mean(x2 * x2, axis=-1, keepdims=True) - mu2 * mu2
    x2n = (x2 - mu2) * lax.rsqrt(var2 + 1e-5) * ln2w_ref[...] + ln2b_ref[...]

    out_ref[...] = x2n.reshape(Bt, S, D).astype(out_ref.dtype)


def _maybe_single_buffer():
    """pl.Buffered(1) for constant (never-changing) operands, if the API supports it."""
    try:
        if "pipeline_mode" not in inspect.signature(pl.BlockSpec).parameters:
            return None
        return pl.Buffered(buffer_count=1)
    except Exception:
        return None


_SINGLE_BUF = _maybe_single_buffer()


def _const_spec(a):
    """Whole (small) parameter array as one block, constant across the grid; DMA'd
    once and single-buffered when the API allows it."""
    nd = a.ndim
    idx = lambda b, _nd=nd: (0,) * _nd
    if _SINGLE_BUF is not None:
        return pl.BlockSpec(a.shape, idx, pipeline_mode=_SINGLE_BUF)
    return pl.BlockSpec(a.shape, idx)


def _vmem_cap_bytes():
    try:
        return int(pltpu.get_tpu_info().vmem_capacity_bytes)
    except Exception:
        return 64 * 2 ** 20   # conservative: v7x per-TensorCore VMEM


def _pick_block_b(B, S, row_target=512):
    """Batch elements per grid step: up to ~512 rows/step so projection & FFN
    matmuls see a tall LHS on the 256-wide MXU, but keep >=2 grid steps (both
    v7x TensorCores busy) whenever that still leaves >=128 rows per step."""
    divs = [d for d in range(1, B + 1) if B % d == 0]
    fits = [d for d in divs if d * S <= row_target] or [1]
    bt = max(fits)
    multi = [d for d in fits if B // d >= 2]
    if multi and max(multi) * S >= 128:
        bt = max(multi)
    return bt


def prepare_params(params, nhead):
    """One-time parameter preparation (hoisted out of the per-call path):
    transpose linear weights, fuse Wq/Wk, fold the 1/sqrt(hd) attention scale
    into the Q projection, cast matmul weights to bf16."""
    D = params["out_proj_w"].shape[0]
    F = params["w1"].shape[0]
    hd = D // nhead
    scale = 1.0 / math.sqrt(hd)
    wq, wk, wv = jnp.split(params["in_proj_w"], 3, axis=0)   # each (D, D)
    bq, bk, bv = jnp.split(params["in_proj_b"], 3, axis=0)   # each (D,)
    return dict(
        wqk_t=jnp.concatenate([wq.T * scale, wk.T], axis=1).astype(jnp.bfloat16),  # (D, 2D)
        bqk=jnp.concatenate([bq * scale, bk]).reshape(1, 2 * D).astype(jnp.float32),
        wv_t=wv.T.astype(jnp.bfloat16),                                            # (D, D)
        bv=bv.reshape(1, D).astype(jnp.float32),
        wo_t=params["out_proj_w"].T.astype(jnp.bfloat16),
        bo=params["out_proj_b"].reshape(1, D).astype(jnp.float32),
        w1_t=params["w1"].T.astype(jnp.bfloat16),                                  # (D, F)
        b1=params["b1"].reshape(1, F).astype(jnp.float32),
        w2_t=params["w2"].T.astype(jnp.bfloat16),                                  # (F, D)
        b2=params["b2"].reshape(1, D).astype(jnp.float32),
        ln1w=params["ln1_w"].reshape(1, D).astype(jnp.float32),
        ln1b=params["ln1_b"].reshape(1, D).astype(jnp.float32),
        ln2w=params["ln2_w"].reshape(1, D).astype(jnp.float32),
        ln2b=params["ln2_b"].reshape(1, D).astype(jnp.float32),
    )


def transformer_encoder_layer(src, pos, prepped, *, nhead):
    """src, pos: (B, S, D) float32. Returns (B, S, D)."""
    B, S, D = src.shape
    F = prepped["w1_t"].shape[1]
    hd = D // nhead

    vmem_cap = _vmem_cap_bytes()
    bt = _pick_block_b(B, S)
    grid = (B // bt,)

    weight_args = list(prepped.values())
    weight_bytes = sum(int(a.size) * a.dtype.itemsize for a in weight_args)

    in_specs = [
        pl.BlockSpec((bt, S, D), lambda b: (b, 0, 0)),   # src block
        pl.BlockSpec((bt, S, D), lambda b: (b, 0, 0)),   # pos block
    ] + [_const_spec(a) for a in weight_args]

    # Advisory cost estimate (helps XLA schedule around the custom call).
    flops = 2 * B * S * (4 * D * D + 2 * D * F) + 4 * B * nhead * S * S * hd
    transcendentals = B * nhead * S * S + 4 * B * S
    bytes_accessed = 3 * B * S * D * 4 + weight_bytes

    # VMEM budget: weights (single- or double-buffered), double-buffered IO blocks,
    # in-flight intermediates with 2x headroom, capped at 90% of physical VMEM.
    R = bt * S
    io_bytes = 2 * 3 * R * D * 4
    inter_bytes = (R * 3 * D * 4 + R * 4 * D * 2          # qk/v f32 + bf16 q/k/v copies
                   + 2 * bt * nhead * S * S * 4           # scores + exp (f32)
                   + 2 * R * D * 4                        # attn + residual
                   + R * F * 6)                           # FFN hidden f32 + bf16
    wbuf = weight_bytes if _SINGLE_BUF is not None else 2 * weight_bytes
    need = wbuf + io_bytes + 2 * inter_bytes
    vmem_limit = int(max(32 * 2 ** 20, min(need, int(0.9 * vmem_cap))))

    kernel = functools.partial(encoder_layer_kernel, nhead=nhead)

    return pl.pallas_call(
        kernel,
        out_shape=jax.ShapeDtypeStruct((B, S, D), src.dtype),
        grid_spec=pltpu.PrefetchScalarGridSpec(
            num_scalar_prefetch=0,
            grid=grid,
            in_specs=in_specs,
            out_specs=pl.BlockSpec((bt, S, D), lambda b: (b, 0, 0)),
            scratch_shapes=[],
        ),
        compiler_params=pltpu.CompilerParams(
            dimension_semantics=("parallel",),
            vmem_limit_bytes=vmem_limit,
        ),
        cost_estimate=pl.CostEstimate(
            flops=flops, transcendentals=transcendentals, bytes_accessed=bytes_accessed),
    )(src, pos, *weight_args)


def init_params(key, d_model, nhead, dim_feedforward):
    ks = jax.random.split(key, 8)
    s = 0.02
    return {
        "in_proj_w": jax.random.normal(ks[0], (3 * d_model, d_model), jnp.float32) * s,
        "in_proj_b": jax.random.normal(ks[1], (3 * d_model,), jnp.float32) * s,
        "out_proj_w": jax.random.normal(ks[2], (d_model, d_model), jnp.float32) * s,
        "out_proj_b": jax.random.normal(ks[3], (d_model,), jnp.float32) * s,
        "w1": jax.random.normal(ks[4], (dim_feedforward, d_model), jnp.float32) * s,
        "b1": jax.random.normal(ks[5], (dim_feedforward,), jnp.float32) * s,
        "w2": jax.random.normal(ks[6], (d_model, dim_feedforward), jnp.float32) * s,
        "b2": jax.random.normal(ks[7], (d_model,), jnp.float32) * s,
        "ln1_w": jnp.ones((d_model,), jnp.float32),
        "ln1_b": jnp.zeros((d_model,), jnp.float32),
        "ln2_w": jnp.ones((d_model,), jnp.float32),
        "ln2_b": jnp.zeros((d_model,), jnp.float32),
    }


if __name__ == "__main__":
    B, S, d_model, nhead, dim_ff = 2, 8, 32, 4, 64
    key = jax.random.PRNGKey(0)
    k_src, k_pos, k_par = jax.random.split(key, 3)
    src = jax.random.normal(k_src, (B, S, d_model), jnp.float32)
    pos = jax.random.normal(k_pos, (B, S, d_model), jnp.float32)
    params = init_params(k_par, d_model, nhead, dim_ff)
    prepped = prepare_params(params, nhead)

    out = transformer_encoder_layer(src, pos, prepped, nhead=nhead)
    jax.block_until_ready(out)
    assert out.shape == (B, S, d_model)
    assert bool(jnp.all(jnp.isfinite(out)))
    print("KERNEL_OK")
</pallas_src>

<mosaic_0001>
module attributes {stable_mosaic.version = 11 : i64} {
  func.func @encoder_layer_kernel(%arg0: i32, %arg1: memref<2x8x32xf32, #tpu.memory_space<vmem>>, %arg2: memref<2x8x32xf32, #tpu.memory_space<vmem>>, %arg3: memref<32x64xbf16, #tpu.memory_space<vmem>>, %arg4: memref<1x64xf32, #tpu.memory_space<vmem>>, %arg5: memref<32x32xbf16, #tpu.memory_space<vmem>>, %arg6: memref<1x32xf32, #tpu.memory_space<vmem>>, %arg7: memref<32x32xbf16, #tpu.memory_space<vmem>>, %arg8: memref<1x32xf32, #tpu.memory_space<vmem>>, %arg9: memref<32x64xbf16, #tpu.memory_space<vmem>>, %arg10: memref<1x64xf32, #tpu.memory_space<vmem>>, %arg11: memref<64x32xbf16, #tpu.memory_space<vmem>>, %arg12: memref<1x32xf32, #tpu.memory_space<vmem>>, %arg13: memref<1x32xf32, #tpu.memory_space<vmem>>, %arg14: memref<1x32xf32, #tpu.memory_space<vmem>>, %arg15: memref<1x32xf32, #tpu.memory_space<vmem>>, %arg16: memref<1x32xf32, #tpu.memory_space<vmem>>, %arg17: memref<2x8x32xf32, #tpu.memory_space<vmem>>) attributes {dimension_semantics = [#tpu.dimension_semantics<parallel>], iteration_bounds = array<i64: 1>, scalar_prefetch = 0 : i64, scratch_operands = 0 : i64, tpu.core_type = #tpu.core_type<tc>, window_params = [{transform_indices = @transform_0, window_bounds = array<i64: 2, 8, 32>}, {transform_indices = @transform_1, window_bounds = array<i64: 2, 8, 32>}, {pipeline_mode = #tpu.pipeline_mode<synchronous>, transform_indices = @transform_2, window_bounds = array<i64: 32, 64>}, {pipeline_mode = #tpu.pipeline_mode<synchronous>, transform_indices = @transform_3, window_bounds = array<i64: 1, 64>}, {pipeline_mode = #tpu.pipeline_mode<synchronous>, transform_indices = @transform_4, window_bounds = array<i64: 32, 32>}, {pipeline_mode = #tpu.pipeline_mode<synchronous>, transform_indices = @transform_5, window_bounds = array<i64: 1, 32>}, {pipeline_mode = #tpu.pipeline_mode<synchronous>, transform_indices = @transform_6, window_bounds = array<i64: 32, 32>}, {pipeline_mode = #tpu.pipeline_mode<synchronous>, transform_indices = @transform_7, window_bounds = array<i64: 1, 32>}, {pipeline_mode = #tpu.pipeline_mode<synchronous>, transform_indices = @transform_8, window_bounds = array<i64: 32, 64>}, {pipeline_mode = #tpu.pipeline_mode<synchronous>, transform_indices = @transform_9, window_bounds = array<i64: 1, 64>}, {pipeline_mode = #tpu.pipeline_mode<synchronous>, transform_indices = @transform_10, window_bounds = array<i64: 64, 32>}, {pipeline_mode = #tpu.pipeline_mode<synchronous>, transform_indices = @transform_11, window_bounds = array<i64: 1, 32>}, {pipeline_mode = #tpu.pipeline_mode<synchronous>, transform_indices = @transform_12, window_bounds = array<i64: 1, 32>}, {pipeline_mode = #tpu.pipeline_mode<synchronous>, transform_indices = @transform_13, window_bounds = array<i64: 1, 32>}, {pipeline_mode = #tpu.pipeline_mode<synchronous>, transform_indices = @transform_14, window_bounds = array<i64: 1, 32>}, {pipeline_mode = #tpu.pipeline_mode<synchronous>, transform_indices = @transform_15, window_bounds = array<i64: 1, 32>}, {transform_indices = @transform_16, window_bounds = array<i64: 2, 8, 32>}]} {
    %c0 = arith.constant 0 : index
    %c0_0 = arith.constant 0 : index
    %c0_1 = arith.constant 0 : index
    %0 = vector.load %arg1[%c0, %c0_0, %c0_1] : memref<2x8x32xf32, #tpu.memory_space<vmem>>, vector<2x8x32xf32>
    %1 = vector.shape_cast %0 : vector<2x8x32xf32> to vector<16x32xf32>
    %c0_2 = arith.constant 0 : index
    %c0_3 = arith.constant 0 : index
    %c0_4 = arith.constant 0 : index
    %2 = vector.load %arg2[%c0_2, %c0_3, %c0_4] : memref<2x8x32xf32, #tpu.memory_space<vmem>>, vector<2x8x32xf32>
    %3 = vector.shape_cast %2 : vector<2x8x32xf32> to vector<16x32xf32>
    %4 = arith.addf %1, %3 : vector<16x32xf32>
    %5 = arith.truncf %4 : vector<16x32xf32> to vector<16x32xbf16>
    %6 = arith.truncf %1 : vector<16x32xf32> to vector<16x32xbf16>
    %c0_5 = arith.constant 0 : index
    %c0_6 = arith.constant 0 : index
    %7 = vector.load %arg3[%c0_5, %c0_6] : memref<32x64xbf16, #tpu.memory_space<vmem>>, vector<32x64xbf16>
    %cst = arith.constant dense<0.000000e+00> : vector<16x64xf32>
    %8 = tpu.matmul %5, %7, %cst {dimension_numbers = #tpu.dot_dimension_numbers<[1], [0], [0], [1], [0, 0, 1, 1], [], []>} : vector<16x32xbf16>, vector<32x64xbf16>, vector<16x64xf32> -> vector<16x64xf32>
    %c0_7 = arith.constant 0 : index
    %c0_8 = arith.constant 0 : index
    %9 = vector.load %arg4[%c0_7, %c0_8] : memref<1x64xf32, #tpu.memory_space<vmem>>, vector<1x64xf32>
    %10 = vector.broadcast %9 : vector<1x64xf32> to vector<16x64xf32>
    %11 = arith.addf %8, %10 : vector<16x64xf32>
    %c0_9 = arith.constant 0 : index
    %c0_10 = arith.constant 0 : index
    %12 = vector.load %arg5[%c0_9, %c0_10] : memref<32x32xbf16, #tpu.memory_space<vmem>>, vector<32x32xbf16>
    %cst_11 = arith.constant dense<0.000000e+00> : vector<16x32xf32>
    %13 = tpu.matmul %6, %12, %cst_11 {dimension_numbers = #tpu.dot_dimension_numbers<[1], [0], [0], [1], [0, 0, 1, 1], [], []>} : vector<16x32xbf16>, vector<32x32xbf16>, vector<16x32xf32> -> vector<16x32xf32>
    %c0_12 = arith.constant 0 : index
    %c0_13 = arith.constant 0 : index
    %14 = vector.load %arg6[%c0_12, %c0_13] : memref<1x32xf32, #tpu.memory_space<vmem>>, vector<1x32xf32>
    %15 = vector.broadcast %14 : vector<1x32xf32> to vector<16x32xf32>
    %16 = arith.addf %13, %15 : vector<16x32xf32>
    %17 = vector.extract_strided_slice %11 {offsets = [0, 0], sizes = [16, 32], strides = [1, 1]} : vector<16x64xf32> to vector<16x32xf32>
    %18 = arith.truncf %17 : vector<16x32xf32> to vector<16x32xbf16>
    %19 = vector.extract_strided_slice %11 {offsets = [0, 32], sizes = [16, 32], strides = [1, 1]} : vector<16x64xf32> to vector<16x32xf32>
    %20 = arith.truncf %19 : vector<16x32xf32> to vector<16x32xbf16>
    %21 = arith.truncf %16 : vector<16x32xf32> to vector<16x32xbf16>
    %22 = vector.extract_strided_slice %18 {offsets = [0, 0], sizes = [8, 8], strides = [1, 1]} : vector<16x32xbf16> to vector<8x8xbf16>
    %23 = vector.extract_strided_slice %18 {offsets = [0, 8], sizes = [8, 8], strides = [1, 1]} : vector<16x32xbf16> to vector<8x8xbf16>
    %24 = vector.extract_strided_slice %18 {offsets = [0, 16], sizes = [8, 8], strides = [1, 1]} : vector<16x32xbf16> to vector<8x8xbf16>
    %25 = vector.extract_strided_slice %18 {offsets = [0, 24], sizes = [8, 8], strides = [1, 1]} : vector<16x32xbf16> to vector<8x8xbf16>
    %26 = vector.extract_strided_slice %18 {offsets = [8, 0], sizes = [8, 8], strides = [1, 1]} : vector<16x32xbf16> to vector<8x8xbf16>
    %27 = vector.extract_strided_slice %18 {offsets = [8, 8], sizes = [8, 8], strides = [1, 1]} : vector<16x32xbf16> to vector<8x8xbf16>
    %28 = vector.extract_strided_slice %18 {offsets = [8, 16], sizes = [8, 8], strides = [1, 1]} : vector<16x32xbf16> to vector<8x8xbf16>
    %29 = vector.extract_strided_slice %18 {offsets = [8, 24], sizes = [8, 8], strides = [1, 1]} : vector<16x32xbf16> to vector<8x8xbf16>
    %30 = vector.shape_cast %22 : vector<8x8xbf16> to vector<1x8x8xbf16>
    %31 = vector.shape_cast %23 : vector<8x8xbf16> to vector<1x8x8xbf16>
    %32 = vector.shape_cast %24 : vector<8x8xbf16> to vector<1x8x8xbf16>
    %33 = vector.shape_cast %25 : vector<8x8xbf16> to vector<1x8x8xbf16>
    %34 = vector.shape_cast %26 : vector<8x8xbf16> to vector<1x8x8xbf16>
    %35 = vector.shape_cast %27 : vector<8x8xbf16> to vector<1x8x8xbf16>
    %36 = vector.shape_cast %28 : vector<8x8xbf16> to vector<1x8x8xbf16>
    %37 = vector.shape_cast %29 : vector<8x8xbf16> to vector<1x8x8xbf16>
    %38 = tpu.concatenate %30, %31, %32, %33, %34, %35, %36, %37 in 0 : vector<1x8x8xbf16>, vector<1x8x8xbf16>, vector<1x8x8xbf16>, vector<1x8x8xbf16>, vector<1x8x8xbf16>, vector<1x8x8xbf16>, vector<1x8x8xbf16>, vector<1x8x8xbf16> -> vector<8x8x8xbf16>
    %39 = vector.extract_strided_slice %20 {offsets = [0, 0], sizes = [8, 8], strides = [1, 1]} : vector<16x32xbf16> to vector<8x8xbf16>
    %40 = vector.extract_strided_slice %20 {offsets = [0, 8], sizes = [8, 8], strides = [1, 1]} : vector<16x32xbf16> to vector<8x8xbf16>
    %41 = vector.extract_strided_slice %20 {offsets = [0, 16], sizes = [8, 8], strides = [1, 1]} : vector<16x32xbf16> to vector<8x8xbf16>
    %42 = vector.extract_strided_slice %20 {offsets = [0, 24], sizes = [8, 8], strides = [1, 1]} : vector<16x32xbf16> to vector<8x8xbf16>
    %43 = vector.extract_strided_slice %20 {offsets = [8, 0], sizes = [8, 8], strides = [1, 1]} : vector<16x32xbf16> to vector<8x8xbf16>
    %44 = vector.extract_strided_slice %20 {offsets = [8, 8], sizes = [8, 8], strides = [1, 1]} : vector<16x32xbf16> to vector<8x8xbf16>
    %45 = vector.extract_strided_slice %20 {offsets = [8, 16], sizes = [8, 8], strides = [1, 1]} : vector<16x32xbf16> to vector<8x8xbf16>
    %46 = vector.extract_strided_slice %20 {offsets = [8, 24], sizes = [8, 8], strides = [1, 1]} : vector<16x32xbf16> to vector<8x8xbf16>
    %47 = vector.shape_cast %39 : vector<8x8xbf16> to vector<1x8x8xbf16>
    %48 = vector.shape_cast %40 : vector<8x8xbf16> to vector<1x8x8xbf16>
    %49 = vector.shape_cast %41 : vector<8x8xbf16> to vector<1x8x8xbf16>
    %50 = vector.shape_cast %42 : vector<8x8xbf16> to vector<1x8x8xbf16>
    %51 = vector.shape_cast %43 : vector<8x8xbf16> to vector<1x8x8xbf16>
    %52 = vector.shape_cast %44 : vector<8x8xbf16> to vector<1x8x8xbf16>
    %53 = vector.shape_cast %45 : vector<8x8xbf16> to vector<1x8x8xbf16>
    %54 = vector.shape_cast %46 : vector<8x8xbf16> to vector<1x8x8xbf16>
    %55 = tpu.concatenate %47, %48, %49, %50, %51, %52, %53, %54 in 0 : vector<1x8x8xbf16>, vector<1x8x8xbf16>, vector<1x8x8xbf16>, vector<1x8x8xbf16>, vector<1x8x8xbf16>, vector<1x8x8xbf16>, vector<1x8x8xbf16>, vector<1x8x8xbf16> -> vector<8x8x8xbf16>
    %56 = vector.extract_strided_slice %21 {offsets = [0, 0], sizes = [8, 8], strides = [1, 1]} : vector<16x32xbf16> to vector<8x8xbf16>
    %57 = vector.extract_strided_slice %21 {offsets = [0, 8], sizes = [8, 8], strides = [1, 1]} : vector<16x32xbf16> to vector<8x8xbf16>
    %58 = vector.extract_strided_slice %21 {offsets = [0, 16], sizes = [8, 8], strides = [1, 1]} : vector<16x32xbf16> to vector<8x8xbf16>
    %59 = vector.extract_strided_slice %21 {offsets = [0, 24], sizes = [8, 8], strides = [1, 1]} : vector<16x32xbf16> to vector<8x8xbf16>
    %60 = vector.extract_strided_slice %21 {offsets = [8, 0], sizes = [8, 8], strides = [1, 1]} : vector<16x32xbf16> to vector<8x8xbf16>
    %61 = vector.extract_strided_slice %21 {offsets = [8, 8], sizes = [8, 8], strides = [1, 1]} : vector<16x32xbf16> to vector<8x8xbf16>
    %62 = vector.extract_strided_slice %21 {offsets = [8, 16], sizes = [8, 8], strides = [1, 1]} : vector<16x32xbf16> to vector<8x8xbf16>
    %63 = vector.extract_strided_slice %21 {offsets = [8, 24], sizes = [8, 8], strides = [1, 1]} : vector<16x32xbf16> to vector<8x8xbf16>
    %64 = vector.shape_cast %56 : vector<8x8xbf16> to vector<1x8x8xbf16>
    %65 = vector.shape_cast %57 : vector<8x8xbf16> to vector<1x8x8xbf16>
    %66 = vector.shape_cast %58 : vector<8x8xbf16> to vector<1x8x8xbf16>
    %67 = vector.shape_cast %59 : vector<8x8xbf16> to vector<1x8x8xbf16>
    %68 = vector.shape_cast %60 : vector<8x8xbf16> to vector<1x8x8xbf16>
    %69 = vector.shape_cast %61 : vector<8x8xbf16> to vector<1x8x8xbf16>
    %70 = vector.shape_cast %62 : vector<8x8xbf16> to vector<1x8x8xbf16>
    %71 = vector.shape_cast %63 : vector<8x8xbf16> to vector<1x8x8xbf16>
    %72 = tpu.concatenate %64, %65, %66, %67, %68, %69, %70, %71 in 0 : vector<1x8x8xbf16>, vector<1x8x8xbf16>, vector<1x8x8xbf16>, vector<1x8x8xbf16>, vector<1x8x8xbf16>, vector<1x8x8xbf16>, vector<1x8x8xbf16>, vector<1x8x8xbf16> -> vector<8x8x8xbf16>
    "tpu.trace_start"() <{level = 10 : i32, message = "bqd,bkd->bqk"}> : () -> ()
    %cst_14 = arith.constant dense<0.000000e+00> : vector<8x8x8xf32>
    %73 = tpu.matmul %38, %55, %cst_14 {dimension_numbers = #tpu.dot_dimension_numbers<[2], [2], [1], [1], [0, 0, 0, 1, 1, 1], [0], [0]>} : vector<8x8x8xbf16>, vector<8x8x8xbf16>, vector<8x8x8xf32> -> vector<8x8x8xf32>
    "tpu.trace_stop"() : () -> ()
    %cst_15 = arith.constant dense<0xFF800000> : vector<8x8xf32>
    %74 = vector.multi_reduction <maximumf>, %73, %cst_15 [2] : vector<8x8x8xf32> to vector<8x8xf32>
    %75 = vector.shape_cast %74 : vector<8x8xf32> to vector<8x8x1xf32>
    %76 = vector.broadcast %75 : vector<8x8x1xf32> to vector<8x8x8xf32>
    %77 = arith.subf %73, %76 : vector<8x8x8xf32>
    %78 = math.exp %77 : vector<8x8x8xf32>
    %cst_16 = arith.constant dense<0.000000e+00> : vector<8x8xf32>
    %79 = vector.multi_reduction <add>, %78, %cst_16 [2] : vector<8x8x8xf32> to vector<8x8xf32>
    %80 = vector.shape_cast %79 : vector<8x8xf32> to vector<8x8x1xf32>
    %81 = tpu.reciprocal %80 {approx = true} : vector<8x8x1xf32> -> vector<8x8x1xf32>
    %82 = vector.broadcast %81 : vector<8x8x1xf32> to vector<8x8x8xf32>
    %83 = arith.mulf %78, %82 : vector<8x8x8xf32>
    %84 = arith.truncf %83 : vector<8x8x8xf32> to vector<8x8x8xbf16>
    "tpu.trace_start"() <{level = 10 : i32, message = "bqk,bkd->bqd"}> : () -> ()
    %cst_17 = arith.constant dense<0.000000e+00> : vector<8x8x8xf32>
    %85 = tpu.matmul %84, %72, %cst_17 {dimension_numbers = #tpu.dot_dimension_numbers<[2], [1], [1], [2], [0, 0, 0, 1, 1, 2], [0], [0]>} : vector<8x8x8xbf16>, vector<8x8x8xbf16>, vector<8x8x8xf32> -> vector<8x8x8xf32>
    "tpu.trace_stop"() : () -> ()
    %86 = vector.extract_strided_slice %85 {offsets = [0, 0, 0], sizes = [1, 8, 8], strides = [1, 1, 1]} : vector<8x8x8xf32> to vector<1x8x8xf32>
    %87 = vector.shape_cast %86 : vector<1x8x8xf32> to vector<8x8xf32>
    %88 = vector.extract_strided_slice %85 {offsets = [1, 0, 0], sizes = [1, 8, 8], strides = [1, 1, 1]} : vector<8x8x8xf32> to vector<1x8x8xf32>
    %89 = vector.shape_cast %88 : vector<1x8x8xf32> to vector<8x8xf32>
    %90 = vector.extract_strided_slice %85 {offsets = [2, 0, 0], sizes = [1, 8, 8], strides = [1, 1, 1]} : vector<8x8x8xf32> to vector<1x8x8xf32>
    %91 = vector.shape_cast %90 : vector<1x8x8xf32> to vector<8x8xf32>
    %92 = vector.extract_strided_slice %85 {offsets = [3, 0, 0], sizes = [1, 8, 8], strides = [1, 1, 1]} : vector<8x8x8xf32> to vector<1x8x8xf32>
    %93 = vector.shape_cast %92 : vector<1x8x8xf32> to vector<8x8xf32>
    %94 = tpu.concatenate %87, %89, %91, %93 in 1 : vector<8x8xf32>, vector<8x8xf32>, vector<8x8xf32>, vector<8x8xf32> -> vector<8x32xf32>
    %95 = vector.extract_strided_slice %85 {offsets = [4, 0, 0], sizes = [1, 8, 8], strides = [1, 1, 1]} : vector<8x8x8xf32> to vector<1x8x8xf32>
    %96 = vector.shape_cast %95 : vector<1x8x8xf32> to vector<8x8xf32>
    %97 = vector.extract_strided_slice %85 {offsets = [5, 0, 0], sizes = [1, 8, 8], strides = [1, 1, 1]} : vector<8x8x8xf32> to vector<1x8x8xf32>
    %98 = vector.shape_cast %97 : vector<1x8x8xf32> to vector<8x8xf32>
    %99 = vector.extract_strided_slice %85 {offsets = [6, 0, 0], sizes = [1, 8, 8], strides = [1, 1, 1]} : vector<8x8x8xf32> to vector<1x8x8xf32>
    %100 = vector.shape_cast %99 : vector<1x8x8xf32> to vector<8x8xf32>
    %101 = vector.extract_strided_slice %85 {offsets = [7, 0, 0], sizes = [1, 8, 8], strides = [1, 1, 1]} : vector<8x8x8xf32> to vector<1x8x8xf32>
    %102 = vector.shape_cast %101 : vector<1x8x8xf32> to vector<8x8xf32>
    %103 = tpu.concatenate %96, %98, %100, %102 in 1 : vector<8x8xf32>, vector<8x8xf32>, vector<8x8xf32>, vector<8x8xf32> -> vector<8x32xf32>
    %104 = tpu.concatenate %94, %103 in 0 : vector<8x32xf32>, vector<8x32xf32> -> vector<16x32xf32>
    %105 = arith.truncf %104 : vector<16x32xf32> to vector<16x32xbf16>
    %c0_18 = arith.constant 0 : index
    %c0_19 = arith.constant 0 : index
    %106 = vector.load %arg7[%c0_18, %c0_19] : memref<32x32xbf16, #tpu.memory_space<vmem>>, vector<32x32xbf16>
    %cst_20 = arith.constant dense<0.000000e+00> : vector<16x32xf32>
    %107 = tpu.matmul %105, %106, %cst_20 {dimension_numbers = #tpu.dot_dimension_numbers<[1], [0], [0], [1], [0, 0, 1, 1], [], []>} : vector<16x32xbf16>, vector<32x32xbf16>, vector<16x32xf32> -> vector<16x32xf32>
    %c0_21 = arith.constant 0 : index
    %c0_22 = arith.constant 0 : index
    %108 = vector.load %arg8[%c0_21, %c0_22] : memref<1x32xf32, #tpu.memory_space<vmem>>, vector<1x32xf32>
    %109 = vector.broadcast %108 : vector<1x32xf32> to vector<16x32xf32>
    %110 = arith.addf %107, %109 : vector<16x32xf32>
    %111 = arith.addf %1, %110 : vector<16x32xf32>
    %cst_23 = arith.constant dense<0.000000e+00> : vector<16xf32>
    %112 = vector.multi_reduction <add>, %111, %cst_23 [1] : vector<16x32xf32> to vector<16xf32>
    %113 = vector.shape_cast %112 : vector<16xf32> to vector<16x1xf32>
    %cst_24 = arith.constant 3.200000e+01 : f32
    %114 = vector.broadcast %cst_24 : f32 to vector<16x1xf32>
    %115 = arith.divf %113, %114 : vector<16x1xf32>
    %116 = arith.mulf %111, %111 : vector<16x32xf32>
    %cst_25 = arith.constant dense<0.000000e+00> : vector<16xf32>
    %117 = vector.multi_reduction <add>, %116, %cst_25 [1] : vector<16x32xf32> to vector<16xf32>
    %118 = vector.shape_cast %117 : vector<16xf32> to vector<16x1xf32>
    %cst_26 = arith.constant 3.200000e+01 : f32
    %119 = vector.broadcast %cst_26 : f32 to vector<16x1xf32>
    %120 = arith.divf %118, %119 : vector<16x1xf32>
    %121 = arith.mulf %115, %115 : vector<16x1xf32>
    %122 = arith.subf %120, %121 : vector<16x1xf32>
    %123 = vector.broadcast %115 : vector<16x1xf32> to vector<16x32xf32>
    %124 = arith.subf %111, %123 : vector<16x32xf32>
    %cst_27 = arith.constant 9.99999974E-6 : f32
    %125 = vector.broadcast %cst_27 : f32 to vector<16x1xf32>
    %126 = arith.addf %122, %125 : vector<16x1xf32>
    %127 = math.rsqrt %126 : vector<16x1xf32>
    %128 = vector.broadcast %127 : vector<16x1xf32> to vector<16x32xf32>
    %129 = arith.mulf %124, %128 : vector<16x32xf32>
    %c0_28 = arith.constant 0 : index
    %c0_29 = arith.constant 0 : index
    %130 = vector.load %arg13[%c0_28, %c0_29] : memref<1x32xf32, #tpu.memory_space<vmem>>, vector<1x32xf32>
    %131 = vector.broadcast %130 : vector<1x32xf32> to vector<16x32xf32>
    %132 = arith.mulf %129, %131 : vector<16x32xf32>
    %c0_30 = arith.constant 0 : index
    %c0_31 = arith.constant 0 : index
    %133 = vector.load %arg14[%c0_30, %c0_31] : memref<1x32xf32, #tpu.memory_space<vmem>>, vector<1x32xf32>
    %134 = vector.broadcast %133 : vector<1x32xf32> to vector<16x32xf32>
    %135 = arith.addf %132, %134 : vector<16x32xf32>
    %136 = arith.truncf %135 : vector<16x32xf32> to vector<16x32xbf16>
    %c0_32 = arith.constant 0 : index
    %c0_33 = arith.constant 0 : index
    %137 = vector.load %arg9[%c0_32, %c0_33] : memref<32x64xbf16, #tpu.memory_space<vmem>>, vector<32x64xbf16>
    %cst_34 = arith.constant dense<0.000000e+00> : vector<16x64xf32>
    %138 = tpu.matmul %136, %137, %cst_34 {dimension_numbers = #tpu.dot_dimension_numbers<[1], [0], [0], [1], [0, 0, 1, 1], [], []>} : vector<16x32xbf16>, vector<32x64xbf16>, vector<16x64xf32> -> vector<16x64xf32>
    %c0_35 = arith.constant 0 : index
    %c0_36 = arith.constant 0 : index
    %139 = vector.load %arg10[%c0_35, %c0_36] : memref<1x64xf32, #tpu.memory_space<vmem>>, vector<1x64xf32>
    %140 = vector.broadcast %139 : vector<1x64xf32> to vector<16x64xf32>
    %141 = arith.addf %138, %140 : vector<16x64xf32>
    %cst_37 = arith.constant 0.000000e+00 : f32
    %142 = vector.broadcast %cst_37 : f32 to vector<16x64xf32>
    %143 = arith.maximumf %141, %142 : vector<16x64xf32>
    %144 = arith.truncf %143 : vector<16x64xf32> to vector<16x64xbf16>
    %c0_38 = arith.constant 0 : index
    %c0_39 = arith.constant 0 : index
    %145 = vector.load %arg11[%c0_38, %c0_39] : memref<64x32xbf16, #tpu.memory_space<vmem>>, vector<64x32xbf16>
    %cst_40 = arith.constant dense<0.000000e+00> : vector<16x32xf32>
    %146 = tpu.matmul %144, %145, %cst_40 {dimension_numbers = #tpu.dot_dimension_numbers<[1], [0], [0], [1], [0, 0, 1, 1], [], []>} : vector<16x64xbf16>, vector<64x32xbf16>, vector<16x32xf32> -> vector<16x32xf32>
    %c0_41 = arith.constant 0 : index
    %c0_42 = arith.constant 0 : index
    %147 = vector.load %arg12[%c0_41, %c0_42] : memref<1x32xf32, #tpu.memory_space<vmem>>, vector<1x32xf32>
    %148 = vector.broadcast %147 : vector<1x32xf32> to vector<16x32xf32>
    %149 = arith.addf %146, %148 : vector<16x32xf32>
    %150 = arith.addf %135, %149 : vector<16x32xf32>
    %cst_43 = arith.constant dense<0.000000e+00> : vector<16xf32>
    %151 = vector.multi_reduction <add>, %150, %cst_43 [1] : vector<16x32xf32> to vector<16xf32>
    %152 = vector.shape_cast %151 : vector<16xf32> to vector<16x1xf32>
    %cst_44 = arith.constant 3.200000e+01 : f32
    %153 = vector.broadcast %cst_44 : f32 to vector<16x1xf32>
    %154 = arith.divf %152, %153 : vector<16x1xf32>
    %155 = arith.mulf %150, %150 : vector<16x32xf32>
    %cst_45 = arith.constant dense<0.000000e+00> : vector<16xf32>
    %156 = vector.multi_reduction <add>, %155, %cst_45 [1] : vector<16x32xf32> to vector<16xf32>
    %157 = vector.shape_cast %156 : vector<16xf32> to vector<16x1xf32>
    %cst_46 = arith.constant 3.200000e+01 : f32
    %158 = vector.broadcast %cst_46 : f32 to vector<16x1xf32>
    %159 = arith.divf %157, %158 : vector<16x1xf32>
    %160 = arith.mulf %154, %154 : vector<16x1xf32>
    %161 = arith.subf %159, %160 : vector<16x1xf32>
    %162 = vector.broadcast %154 : vector<16x1xf32> to vector<16x32xf32>
    %163 = arith.subf %150, %162 : vector<16x32xf32>
    %cst_47 = arith.constant 9.99999974E-6 : f32
    %164 = vector.broadcast %cst_47 : f32 to vector<16x1xf32>
    %165 = arith.addf %161, %164 : vector<16x1xf32>
    %166 = math.rsqrt %165 : vector<16x1xf32>
    %167 = vector.broadcast %166 : vector<16x1xf32> to vector<16x32xf32>
    %168 = arith.mulf %163, %167 : vector<16x32xf32>
    %c0_48 = arith.constant 0 : index
    %c0_49 = arith.constant 0 : index
    %169 = vector.load %arg15[%c0_48, %c0_49] : memref<1x32xf32, #tpu.memory_space<vmem>>, vector<1x32xf32>
    %170 = vector.broadcast %169 : vector<1x32xf32> to vector<16x32xf32>
    %171 = arith.mulf %168, %170 : vector<16x32xf32>
    %c0_50 = arith.constant 0 : index
    %c0_51 = arith.constant 0 : index
    %172 = vector.load %arg16[%c0_50, %c0_51] : memref<1x32xf32, #tpu.memory_space<vmem>>, vector<1x32xf32>
    %173 = vector.broadcast %172 : vector<1x32xf32> to vector<16x32xf32>
    %174 = arith.addf %171, %173 : vector<16x32xf32>
    %175 = vector.shape_cast %174 : vector<16x32xf32> to vector<2x8x32xf32>
    %c0_52 = arith.constant 0 : index
    %c0_53 = arith.constant 0 : index
    %c0_54 = arith.constant 0 : index
    %176 = vector.load %arg17[%c0_52, %c0_53, %c0_54] : memref<2x8x32xf32, #tpu.memory_space<vmem>>, vector<2x8x32xf32>
    tpu.vector_store %arg17[%c0_52, %c0_53, %c0_54], %175 {strides = array<i32>} : memref<2x8x32xf32, #tpu.memory_space<vmem>>, vector<2x8x32xf32>,
    return
  }
  func.func @transform_0(%arg0: i32) -> (i32, i32, i32) {
    %c0_i32 = arith.constant 0 : i32
    %c0_i32_0 = arith.constant 0 : i32
    %c0_i32_1 = arith.constant 0 : i32
    return %arg0, %c0_i32, %c0_i32_0 : i32, i32, i32
  }
  func.func @transform_1(%arg0: i32) -> (i32, i32, i32) {
    %c0_i32 = arith.constant 0 : i32
    %c0_i32_0 = arith.constant 0 : i32
    %c0_i32_1 = arith.constant 0 : i32
    return %arg0, %c0_i32, %c0_i32_0 : i32, i32, i32
  }
  func.func @transform_2(%arg0: i32) -> (i32, i32) {
    %c0_i32 = arith.constant 0 : i32
    %c0_i32_0 = arith.constant 0 : i32
    %c0_i32_1 = arith.constant 0 : i32
    return %c0_i32, %c0_i32_0 : i32, i32
  }
  func.func @transform_3(%arg0: i32) -> (i32, i32) {
    %c0_i32 = arith.constant 0 : i32
    %c0_i32_0 = arith.constant 0 : i32
    %c0_i32_1 = arith.constant 0 : i32
    return %c0_i32, %c0_i32_0 : i32, i32
  }
  func.func @transform_4(%arg0: i32) -> (i32, i32) {
    %c0_i32 = arith.constant 0 : i32
    %c0_i32_0 = arith.constant 0 : i32
    %c0_i32_1 = arith.constant 0 : i32
    return %c0_i32, %c0_i32_0 : i32, i32
  }
  func.func @transform_5(%arg0: i32) -> (i32, i32) {
    %c0_i32 = arith.constant 0 : i32
    %c0_i32_0 = arith.constant 0 : i32
    %c0_i32_1 = arith.constant 0 : i32
    return %c0_i32, %c0_i32_0 : i32, i32
  }
  func.func @transform_6(%arg0: i32) -> (i32, i32) {
    %c0_i32 = arith.constant 0 : i32
    %c0_i32_0 = arith.constant 0 : i32
    %c0_i32_1 = arith.constant 0 : i32
    return %c0_i32, %c0_i32_0 : i32, i32
  }
  func.func @transform_7(%arg0: i32) -> (i32, i32) {
    %c0_i32 = arith.constant 0 : i32
    %c0_i32_0 = arith.constant 0 : i32
    %c0_i32_1 = arith.constant 0 : i32
    return %c0_i32, %c0_i32_0 : i32, i32
  }
  func.func @transform_8(%arg0: i32) -> (i32, i32) {
    %c0_i32 = arith.constant 0 : i32
    %c0_i32_0 = arith.constant 0 : i32
    %c0_i32_1 = arith.constant 0 : i32
    return %c0_i32, %c0_i32_0 : i32, i32
  }
  func.func @transform_9(%arg0: i32) -> (i32, i32) {
    %c0_i32 = arith.constant 0 : i32
    %c0_i32_0 = arith.constant 0 : i32
    %c0_i32_1 = arith.constant 0 : i32
    return %c0_i32, %c0_i32_0 : i32, i32
  }
  func.func @transform_10(%arg0: i32) -> (i32, i32) {
    %c0_i32 = arith.constant 0 : i32
    %c0_i32_0 = arith.constant 0 : i32
    %c0_i32_1 = arith.constant 0 : i32
    return %c0_i32, %c0_i32_0 : i32, i32
  }
  func.func @transform_11(%arg0: i32) -> (i32, i32) {
    %c0_i32 = arith.constant 0 : i32
    %c0_i32_0 = arith.constant 0 : i32
    %c0_i32_1 = arith.constant 0 : i32
    return %c0_i32, %c0_i32_0 : i32, i32
  }
  func.func @transform_12(%arg0: i32) -> (i32, i32) {
    %c0_i32 = arith.constant 0 : i32
    %c0_i32_0 = arith.constant 0 : i32
    %c0_i32_1 = arith.constant 0 : i32
    return %c0_i32, %c0_i32_0 : i32, i32
  }
  func.func @transform_13(%arg0: i32) -> (i32, i32) {
    %c0_i32 = arith.constant 0 : i32
    %c0_i32_0 = arith.constant 0 : i32
    %c0_i32_1 = arith.constant 0 : i32
    return %c0_i32, %c0_i32_0 : i32, i32
  }
  func.func @transform_14(%arg0: i32) -> (i32, i32) {
    %c0_i32 = arith.constant 0 : i32
    %c0_i32_0 = arith.constant 0 : i32
    %c0_i32_1 = arith.constant 0 : i32
    return %c0_i32, %c0_i32_0 : i32, i32
  }
  func.func @transform_15(%arg0: i32) -> (i32, i32) {
    %c0_i32 = arith.constant 0 : i32
    %c0_i32_0 = arith.constant 0 : i32
    %c0_i32_1 = arith.constant 0 : i32
    return %c0_i32, %c0_i32_0 : i32, i32
  }
  func.func @transform_16(%arg0: i32) -> (i32, i32, i32) {
    %c0_i32 = arith.constant 0 : i32
    %c0_i32_0 = arith.constant 0 : i32
    %c0_i32_1 = arith.constant 0 : i32
    return %arg0, %c0_i32, %c0_i32_0 : i32, i32, i32
  }
}

</mosaic_0001>

<llo_original>
// kernel: tpu_custom_call.1
$region0: #{tpu_custom_call.1}
  #allocation0 [shape = 'u32[]', space=smem, size = 0x4, offset = 0x4, fixed_abs, tag = 'smem constant byte address 0x4 - core index']
  #allocation1 [shape = 'u32[144,128]{1,0:T(1,128)}', space=vmem, size = 0x12000, scoped, tag = 'internal scratch']
  %s0 = inlined_call_operand.vmem [shape: f32[2,8,32], index: 0, kind: input, shape index: {}]
  %s1 = inlined_call_operand.vmem [shape: f32[2,8,32], index: 1, kind: input, shape index: {}]
  %s2 = inlined_call_operand.vmem [shape: bf16[32,64], index: 2, kind: input, shape index: {}]
  %s3 = inlined_call_operand.vmem [shape: f32[1,64], index: 3, kind: input, shape index: {}]
  %s4 = inlined_call_operand.hbm [shape: bf16[32,32], index: 4, kind: input, shape index: {}]
  %s5 = inlined_call_operand.vmem [shape: f32[1,32], index: 5, kind: input, shape index: {}]
  %s6 = inlined_call_operand.hbm [shape: bf16[32,32], index: 6, kind: input, shape index: {}]
  %s7 = inlined_call_operand.vmem [shape: f32[1,32], index: 7, kind: input, shape index: {}]
  %s8 = inlined_call_operand.hbm [shape: bf16[32,64], index: 8, kind: input, shape index: {}]
  %s9 = inlined_call_operand.vmem [shape: f32[1,64], index: 9, kind: input, shape index: {}]
  %s10 = inlined_call_operand.vmem [shape: bf16[64,32], index: 10, kind: input, shape index: {}]
  %s11 = inlined_call_operand.vmem [shape: f32[1,32], index: 11, kind: input, shape index: {}]
  %s12 = inlined_call_operand.vmem [shape: f32[1,32], index: 12, kind: input, shape index: {}]
  %s13 = inlined_call_operand.vmem [shape: f32[1,32], index: 13, kind: input, shape index: {}]
  %s14 = inlined_call_operand.vmem [shape: f32[1,32], index: 14, kind: input, shape index: {}]
  %s15 = inlined_call_operand.vmem [shape: f32[1,32], index: 15, kind: input, shape index: {}]
  %s16 = inlined_call_operand.hbm [shape: f32[2,8,32], index: 16, kind: output, shape index: {}]
  %s17 = sld [smem:[#allocation0]]
  $region86: #{tpu_custom_call.1} parent=0
    _
  %s19 = ssub.s32 1, %s17
  %s20 = scalar_select 0, %s19, %s17
  $region1: #{tpu_custom_call.1} parent=0
    #allocation2 [shape = 'u8[8192]{0}', space=vmem, size = 0x2000, scoped, tag = 'input window, operand 4, single buffered']
    #allocation3 [shape = 's32[1]{0}', space=sflag, size = 0x4, scoped, tag = 'scoped memory for tpu_custom_call.1']
    #allocation4 [shape = 's32[1]{0}', space=sflag, size = 0x4, scoped, tag = 'scoped memory for tpu_custom_call.1']
    #allocation5 [shape = 'u8[8192]{0}', space=vmem, size = 0x2000, scoped, tag = 'input window, operand 6, single buffered']
    #allocation6 [shape = 's32[1]{0}', space=sflag, size = 0x4, scoped, tag = 'scoped memory for tpu_custom_call.1']
    #allocation7 [shape = 'u8[8192]{0}', space=vmem, size = 0x2000, scoped, tag = 'input window, operand 8, single buffered']
    #allocation8 [shape = 'u8[8192]{0}', space=vmem, size = 0x2000, scoped, tag = 'output window, operand 0, single buffered']
    %21 = vsyncpa [#allocation3], 0
    %22 = vsyncpa [#allocation6], 0
    %23 = vsyncpa [#allocation4], 0
    // Predicated region
    $region2: #{tpu_custom_call.1} parent=1 // pred_check
      _
    $region3: #{tpu_custom_call.1} parent=1 // pred_check_branch
      %25 = sbr.rel (0) target = $region5
    $region4: #{tpu_custom_call.1} parent=1 // pred_region
      _
    $region5: #{tpu_custom_call.1} parent=1 // pred_fallthru
      _
    // Predicated region
    $region6: #{tpu_custom_call.1} parent=1 // pred_check
      _
    $region7: #{tpu_custom_call.1} parent=1 // pred_check_branch
      %27 = sbr.rel (0) target = $region9
    $region8: #{tpu_custom_call.1} parent=1 // pred_region
      _
    $region9: #{tpu_custom_call.1} parent=1 // pred_fallthru
      _
    // Predicated region
    $region10: #{tpu_custom_call.1} parent=1 // pred_check
      _
    $region11: #{tpu_custom_call.1} parent=1 // pred_check_branch
      %29 = sbr.rel (0) target = $region13
    $region12: #{tpu_custom_call.1} parent=1 // pred_region
      _
    $region13: #{tpu_custom_call.1} parent=1 // pred_fallthru
      _
    // Predicated region
    $region14: #{tpu_custom_call.1} parent=1 // pred_check
      _
    $region15: #{tpu_custom_call.1} parent=1 // pred_check_branch
      %31 = sbr.rel (0) target = $region17
    $region16: #{tpu_custom_call.1} parent=1 // pred_region
      _
    $region17: #{tpu_custom_call.1} parent=1 // pred_fallthru
      _
    // Predicated region
    $region18: #{tpu_custom_call.1} parent=1 // pred_check
      _
    $region19: #{tpu_custom_call.1} parent=1 // pred_check_branch
      %33 = sbr.rel (0) target = $region21
    $region20: #{tpu_custom_call.1} parent=1 // pred_region
      %s35 = ssub.s32 256, 256
      %36 = vsyncadd [#allocation3], %s35
      %s37 = sshll.u32 [#allocation2], 4
      %s38 = int_to_ptr.vmem [resolvable:$true] %s37
      %43 = dma.hbm_to_vmem [thread:$0]  %s4, 256, %s38, [#allocation3], 64, 64, 4
    $region21: #{tpu_custom_call.1} parent=1 // pred_fallthru
      _
    // Predicated region
    $region22: #{tpu_custom_call.1} parent=1 // pred_check
      _
    $region23: #{tpu_custom_call.1} parent=1 // pred_check_branch
      %45 = sbr.rel (0) target = $region25
    $region24: #{tpu_custom_call.1} parent=1 // pred_region
      _
    $region25: #{tpu_custom_call.1} parent=1 // pred_fallthru
      _
    // Predicated region
    $region26: #{tpu_custom_call.1} parent=1 // pred_check
      _
    $region27: #{tpu_custom_call.1} parent=1 // pred_check_branch
      %47 = sbr.rel (0) target = $region29
    $region28: #{tpu_custom_call.1} parent=1 // pred_region
      %s49 = ssub.s32 256, 256
      %50 = vsyncadd [#allocation6], %s49
      %s51 = sshll.u32 [#allocation5], 4
      %s52 = int_to_ptr.vmem [resolvable:$true] %s51
      %57 = dma.hbm_to_vmem [thread:$0]  %s6, 256, %s52, [#allocation6], 64, 64, 4
    $region29: #{tpu_custom_call.1} parent=1 // pred_fallthru
      _
    // Predicated region
    $region30: #{tpu_custom_call.1} parent=1 // pred_check
      _
    $region31: #{tpu_custom_call.1} parent=1 // pred_check_branch
      %59 = sbr.rel (0) target = $region33
    $region32: #{tpu_custom_call.1} parent=1 // pred_region
      _
    $region33: #{tpu_custom_call.1} parent=1 // pred_fallthru
      _
    // Predicated region
    $region34: #{tpu_custom_call.1} parent=1 // pred_check
      _
    $region35: #{tpu_custom_call.1} parent=1 // pred_check_branch
      %61 = sbr.rel (0) target = $region37
    $region36: #{tpu_custom_call.1} parent=1 // pred_region
      %s63 = ssub.s32 256, 256
      %64 = vsyncadd [#allocation6], %s63
      %s65 = sshll.u32 [#allocation7], 4
      %s66 = int_to_ptr.vmem [resolvable:$true] %s65
      %71 = dma.hbm_to_vmem [thread:$0]  %s8, 256, %s66, [#allocation6], 64, 64, 4
    $region37: #{tpu_custom_call.1} parent=1 // pred_fallthru
      _
    // Predicated region
    $region38: #{tpu_custom_call.1} parent=1 // pred_check
      _
    $region39: #{tpu_custom_call.1} parent=1 // pred_check_branch
      %73 = sbr.rel (0) target = $region41
    $region40: #{tpu_custom_call.1} parent=1 // pred_region
      _
    $region41: #{tpu_custom_call.1} parent=1 // pred_fallthru
      _
    // Predicated region
    $region42: #{tpu_custom_call.1} parent=1 // pred_check
      _
    $region43: #{tpu_custom_call.1} parent=1 // pred_check_branch
      %75 = sbr.rel (0) target = $region45
    $region44: #{tpu_custom_call.1} parent=1 // pred_region
      _
    $region45: #{tpu_custom_call.1} parent=1 // pred_fallthru
      _
    // Predicated region
    $region46: #{tpu_custom_call.1} parent=1 // pred_check
      _
    $region47: #{tpu_custom_call.1} parent=1 // pred_check_branch
      %77 = sbr.rel (0) target = $region49
    $region48: #{tpu_custom_call.1} parent=1 // pred_region
      _
    $region49: #{tpu_custom_call.1} parent=1 // pred_fallthru
      _
    // Predicated region
    $region50: #{tpu_custom_call.1} parent=1 // pred_check
      _
    $region51: #{tpu_custom_call.1} parent=1 // pred_check_branch
      %79 = sbr.rel (0) target = $region53
    $region52: #{tpu_custom_call.1} parent=1 // pred_region
      _
    $region53: #{tpu_custom_call.1} parent=1 // pred_fallthru
      _
    // Predicated region
    $region54: #{tpu_custom_call.1} parent=1 // pred_check
      _
    $region55: #{tpu_custom_call.1} parent=1 // pred_check_branch
      %81 = sbr.rel (0) target = $region57
    $region56: #{tpu_custom_call.1} parent=1 // pred_region
      _
    $region57: #{tpu_custom_call.1} parent=1 // pred_fallthru
      _
    // Predicated region
    $region58: #{tpu_custom_call.1} parent=1 // pred_check
      _
    $region59: #{tpu_custom_call.1} parent=1 // pred_check_branch
      %83 = sbr.rel (0) target = $region61
    $region60: #{tpu_custom_call.1} parent=1 // pred_region
      _
    $region61: #{tpu_custom_call.1} parent=1 // pred_fallthru
      _
    // Predicated region
    $region62: #{tpu_custom_call.1} parent=1 // pred_check
      _
    $region63: #{tpu_custom_call.1} parent=1 // pred_check_branch
      %85 = sbr.rel (0) target = $region65
    $region64: #{tpu_custom_call.1} parent=1 // pred_region
      _
    $region65: #{tpu_custom_call.1} parent=1 // pred_fallthru
      _
    // Predicated region
    $region66: #{tpu_custom_call.1} parent=1 // pred_check
      _
    $region67: #{tpu_custom_call.1} parent=1 // pred_check_branch
      %87 = sbr.rel (0) target = $region69
    $region68: #{tpu_custom_call.1} parent=1 // pred_region
      %88 = dma.done [#allocation3], 256
    $region69: #{tpu_custom_call.1} parent=1 // pred_fallthru
      _
    // Predicated region
    $region70: #{tpu_custom_call.1} parent=1 // pred_check
      _
    $region71: #{tpu_custom_call.1} parent=1 // pred_check_branch
      %90 = sbr.rel (0) target = $region73
    $region72: #{tpu_custom_call.1} parent=1 // pred_region
      %91 = dma.done [#allocation6], 256
    $region73: #{tpu_custom_call.1} parent=1 // pred_fallthru
      _
    // Predicated region
    $region74: #{tpu_custom_call.1} parent=1 // pred_check
      _
    $region75: #{tpu_custom_call.1} parent=1 // pred_check_branch
      %93 = sbr.rel (0) target = $region77
    $region76: #{tpu_custom_call.1} parent=1 // pred_region
      %94 = dma.done [#allocation6], 256
    $region77: #{tpu_custom_call.1} parent=1 // pred_fallthru
      _
    %v96 = vld [vmem:[%s0] sm:$0xff]
    %v97 = vld [vmem:[%s0 + $0x8] sm:$0xff]
    %v98 = vld [vmem:[%s1] sm:$0xff]
    %v99 = vld [vmem:[%s1 + $0x8] sm:$0xff]
    %v100 = vadd.f32 %v96, %v98
    %v101 = vadd.f32 %v97, %v99
    %v102 = vpack.c.bf16 %v101, %v100
    %v103 = vpack.c.bf16 %v97, %v96
    %v104 = vld [vmem:[%s2] sm:$0xf]
    %v105 = vld [vmem:[%s2 + $0x4] sm:$0xf]
    %v106 = vld [vmem:[%s2 + $0x8] sm:$0xf]
    %v107 = vld [vmem:[%s2 + $0xc] sm:$0xf]
    %v108 = vld [vmem:[%s3] sm:$0x1]
    %v110 = vlaneseq
    %v111 = vshrl.u32 %v110, 7
    %v112 = vsub.s32 0, %v111
    %v113 = vrot.slane %v108, %v112
    %v119 = vunpack.c.l.b16 %v104
    %v120 = vunpack.c.l.b16 %v105
    %v121 = vunpack.c.l.b16 %v106
    %v122 = vunpack.c.l.b16 %v107
    %v123 = vpack.c.b16 %v120, %v119
    %v124 = vpack.c.b16 %v122, %v121
    %vm127 = vcmask 261120
    %v129 = vsel %vm127, %v102, 0
    %131 = vmatprep.subr.bf16.mxu0 0
    %132 = vmatpush1.bf16.msra.mxu0 %v123
    %133 = vmatprep.subr.bf16.mxu0 0
    %134 = vmatpush1.bf16.msra.mxu0 %v124
    %135 = vmatprep.subr.bf16.mxu0 0
    %136 = vmatpush1.bf16.msra.mxu0 0
    %137 = vmatprep.subr.bf16.mxu0 0
    %138 = vmatpush1.bf16.msra.mxu0 0
    %139 = vmatprep.subr.bf16.mxu0 0
    %140 = vmatpush1.bf16.msra.mxu0 0
    %141 = vmatprep.subr.bf16.mxu0 0
    %142 = vmatpush1.bf16.msra.mxu0 0
    %143 = vmatprep.subr.bf16.mxu0 0
    %144 = vmatpush1.bf16.msra.mxu0 0
    %145 = vmatprep.subr.bf16.mxu0 0
    %146 = vmatpush1.bf16.msra.mxu0 0
    %147 = vmatprep.subr.bf16.mxu0 0
    %148 = vmatpush1.bf16.msra.mxu0 0
    %149 = vmatprep.subr.bf16.mxu0 0
    %150 = vmatpush1.bf16.msra.mxu0 0
    %151 = vmatprep.subr.bf16.mxu0 0
    %152 = vmatpush1.bf16.msra.mxu0 0
    %153 = vmatprep.subr.bf16.mxu0 0
    %154 = vmatpush1.bf16.msra.mxu0 0
    %155 = vmatprep.subr.bf16.mxu0 0
    %156 = vmatpush1.bf16.msra.mxu0 0
    %157 = vmatprep.subr.bf16.mxu0 0
    %158 = vmatpush1.bf16.msra.mxu0 0
    %159 = vmatprep.subr.bf16.mxu0 0
    %160 = vmatpush1.bf16.msra.mxu0 0
    %161 = vmatprep.subr.bf16.mxu0 0
    %162 = vmatpush1.bf16.msra.mxu0 0
    %163 = vmatprep.mubr.bf16.mxu0 0
    %164 = vmatmul.mubr.bf16.gmra.mrb[0].mxu0 %v129
    %v165 = vpop.f32.mrb[0].mxu0
    %v166 = vadd.f32 %v113, %v165
    %v167 = vpop.f32.mrb[0].mxu0
    %v168 = vpop.f32.mrb[0].mxu0
    %v169 = vadd.f32 %v113, %v168
    %v170 = vpop.f32.mrb[0].mxu0
    %171 = vdwg.mxu0
    %v172 = vld [vmem:[#allocation2] sm:$0xf]
    %v173 = vld [vmem:[#allocation2 + $0x4] sm:$0xf]
    %v174 = vld [vmem:[#allocation2 + $0x8] sm:$0xf]
    %v175 = vld [vmem:[#allocation2 + $0xc] sm:$0xf]
    %v176 = vld [vmem:[%s5] sm:$0x1]
    %v178 = vlaneseq
    %v179 = vshrl.u32 %v178, 7
    %v180 = vsub.s32 0, %v179
    %v181 = vrot.slane %v176, %v180
    %v187 = vunpack.c.l.b16 %v172
    %v188 = vunpack.c.l.b16 %v173
    %v189 = vunpack.c.l.b16 %v174
    %v190 = vunpack.c.l.b16 %v175
    %v191 = vpack.c.b16 %v188, %v187
    %v192 = vpack.c.b16 %v190, %v189
    %v196 = vsel %vm127, %v103, 0
    %198 = vmatprep.subr.bf16.mxu0 0
    %199 = vmatpush1.bf16.msra.mxu0 %v191
    %200 = vmatprep.subr.bf16.mxu0 0
    %201 = vmatpush1.bf16.msra.mxu0 %v192
    %202 = vmatprep.subr.bf16.mxu0 0
    %203 = vmatpush1.bf16.msra.mxu0 0
    %204 = vmatprep.subr.bf16.mxu0 0
    %205 = vmatpush1.bf16.msra.mxu0 0
    %206 = vmatprep.subr.bf16.mxu0 0
    %207 = vmatpush1.bf16.msra.mxu0 0
    %208 = vmatprep.subr.bf16.mxu0 0
    %209 = vmatpush1.bf16.msra.mxu0 0
    %210 = vmatprep.subr.bf16.mxu0 0
    %211 = vmatpush1.bf16.msra.mxu0 0
    %212 = vmatprep.subr.bf16.mxu0 0
    %213 = vmatpush1.bf16.msra.mxu0 0
    %214 = vmatprep.subr.bf16.mxu0 0
    %215 = vmatpush1.bf16.msra.mxu0 0
    %216 = vmatprep.subr.bf16.mxu0 0
    %217 = vmatpush1.bf16.msra.mxu0 0
    %218 = vmatprep.subr.bf16.mxu0 0
    %219 = vmatpush1.bf16.msra.mxu0 0
    %220 = vmatprep.subr.bf16.mxu0 0
    %221 = vmatpush1.bf16.msra.mxu0 0
    %222 = vmatprep.subr.bf16.mxu0 0
    %223 = vmatpush1.bf16.msra.mxu0 0
    %224 = vmatprep.subr.bf16.mxu0 0
    %225 = vmatpush1.bf16.msra.mxu0 0
    %226 = vmatprep.subr.bf16.mxu0 0
    %227 = vmatpush1.bf16.msra.mxu0 0
    %228 = vmatprep.subr.bf16.mxu0 0
    %229 = vmatpush1.bf16.msra.mxu0 0
    %230 = vmatprep.mubr.bf16.mxu0 0
    %231 = vmatmul.mubr.bf16.gmra.mrb[0].mxu0 %v196
    %v232 = vpop.f32.mrb[0].mxu0
    %v233 = vadd.f32 %v181, %v232
    %v234 = vpop.f32.mrb[0].mxu0
    %v235 = vpop.f32.mrb[0].mxu0
    %v236 = vadd.f32 %v181, %v235
    %v237 = vpop.f32.mrb[0].mxu0
    %238 = vdwg.mxu0
    %v239 = vpack.c.bf16 %v169, %v166
    %v240 = vpack.c.bf16 %v236, %v233
    %242 = vrot.lane.b32.xlu0 %v239, 120
    %v243 = vpop.permute.xlu0 %242
    %244 = vrot.lane.b32.xlu0 %v239, 112
    %v245 = vpop.permute.xlu0 %244
    %246 = vrot.lane.b32.xlu0 %v239, 104
    %v247 = vpop.permute.xlu0 %246
    %v248 = vrot.slane %v239, 4
    %249 = vrot.lane.b32.xlu0 %v248, 120
    %v250 = vpop.permute.xlu0 %249
    %251 = vrot.lane.b32.xlu0 %v248, 112
    %v252 = vpop.permute.xlu0 %251
    %253 = vrot.lane.b32.xlu0 %v248, 104
    %v254 = vpop.permute.xlu0 %253
    %256 = vrot.lane.b32.xlu0 %v240, 120
    %v257 = vpop.permute.xlu0 %256
    %258 = vrot.lane.b32.xlu0 %v240, 112
    %v259 = vpop.permute.xlu0 %258
    %260 = vrot.lane.b32.xlu0 %v240, 104
    %v261 = vpop.permute.xlu0 %260
    %v262 = vrot.slane %v240, 4
    %263 = vrot.lane.b32.xlu0 %v262, 120
    %v264 = vpop.permute.xlu0 %263
    %265 = vrot.lane.b32.xlu0 %v262, 112
    %v266 = vpop.permute.xlu0 %265
    %267 = vrot.lane.b32.xlu0 %v262, 104
    %v268 = vpop.permute.xlu0 %267
    %269 = vrot.lane.b32.xlu0 %v239, 96
    %v270 = vpop.permute.xlu0 %269
    %vm271 = vcmask 64512
    %v273 = vsel %vm271, %v239, 0
    %v276 = vsel %vm271, %v270, 0
    %278 = vmatprep.subr.bf16.mxu0 0
    %279 = vmatpush1.bf16.xpose.msra.mxu0 %v276
    %280 = vmatprep.subr.bf16.mxu0 0
    %281 = vmatpush1.bf16.xpose.msra.mxu0 0
    %282 = vmatprep.subr.bf16.mxu0 0
    %283 = vmatpush1.bf16.xpose.msra.mxu0 0
    %284 = vmatprep.subr.bf16.mxu0 0
    %285 = vmatpush1.bf16.xpose.msra.mxu0 0
    %286 = vmatprep.subr.bf16.mxu0 0
    %287 = vmatpush1.bf16.xpose.msra.mxu0 0
    %288 = vmatprep.subr.bf16.mxu0 0
    %289 = vmatpush1.bf16.xpose.msra.mxu0 0
    %290 = vmatprep.subr.bf16.mxu0 0
    %291 = vmatpush1.bf16.xpose.msra.mxu0 0
    %292 = vmatprep.subr.bf16.mxu0 0
    %293 = vmatpush1.bf16.xpose.msra.mxu0 0
    %294 = vmatprep.subr.bf16.mxu0 0
    %295 = vmatpush1.bf16.xpose.msra.mxu0 0
    %296 = vmatprep.subr.bf16.mxu0 0
    %297 = vmatpush1.bf16.xpose.msra.mxu0 0
    %298 = vmatprep.subr.bf16.mxu0 0
    %299 = vmatpush1.bf16.xpose.msra.mxu0 0
    %300 = vmatprep.subr.bf16.mxu0 0
    %301 = vmatpush1.bf16.xpose.msra.mxu0 0
    %302 = vmatprep.subr.bf16.mxu0 0
    %303 = vmatpush1.bf16.xpose.msra.mxu0 0
    %304 = vmatprep.subr.bf16.mxu0 0
    %305 = vmatpush1.bf16.xpose.msra.mxu0 0
    %306 = vmatprep.subr.bf16.mxu0 0
    %307 = vmatpush1.bf16.xpose.msra.mxu0 0
    %308 = vmatprep.subr.bf16.mxu0 0
    %309 = vmatpush1.bf16.xpose.msra.mxu0 0
    %310 = vmatprep.mubr.bf16.mxu0 0
    %311 = vmatmul.mubr.bf16.gmra.mrb[0].mxu0 %v273
    %v312 = vpop.f32.mrb[0].mxu0
    %v313 = vadd.f32 0.0, %v312
    %v314 = vpop.f32.mrb[0].mxu0
    %v315 = vpop.f32.mrb[0].mxu0
    %v316 = vpop.f32.mrb[0].mxu0
    %317 = vdwg.mxu0
    %318 = vrot.lane.b32.xlu0 %v243, 96
    %v319 = vpop.permute.xlu0 %318
    %v321 = vsel %vm271, %v243, 0
    %v324 = vsel %vm271, %v319, 0
    %326 = vmatprep.subr.bf16.mxu0 0
    %327 = vmatpush1.bf16.xpose.msra.mxu0 %v324
    %328 = vmatprep.subr.bf16.mxu0 0
    %329 = vmatpush1.bf16.xpose.msra.mxu0 0
    %330 = vmatprep.subr.bf16.mxu0 0
    %331 = vmatpush1.bf16.xpose.msra.mxu0 0
    %332 = vmatprep.subr.bf16.mxu0 0
    %333 = vmatpush1.bf16.xpose.msra.mxu0 0
    %334 = vmatprep.subr.bf16.mxu0 0
    %335 = vmatpush1.bf16.xpose.msra.mxu0 0
    %336 = vmatprep.subr.bf16.mxu0 0
    %337 = vmatpush1.bf16.xpose.msra.mxu0 0
    %338 = vmatprep.subr.bf16.mxu0 0
    %339 = vmatpush1.bf16.xpose.msra.mxu0 0
    %340 = vmatprep.subr.bf16.mxu0 0
    %341 = vmatpush1.bf16.xpose.msra.mxu0 0
    %342 = vmatprep.subr.bf16.mxu0 0
    %343 = vmatpush1.bf16.xpose.msra.mxu0 0
    %344 = vmatprep.subr.bf16.mxu0 0
    %345 = vmatpush1.bf16.xpose.msra.mxu0 0
    %346 = vmatprep.subr.bf16.mxu0 0
    %347 = vmatpush1.bf16.xpose.msra.mxu0 0
    %348 = vmatprep.subr.bf16.mxu0 0
    %349 = vmatpush1.bf16.xpose.msra.mxu0 0
    %350 = vmatprep.subr.bf16.mxu0 0
    %351 = vmatpush1.bf16.xpose.msra.mxu0 0
    %352 = vmatprep.subr.bf16.mxu0 0
    %353 = vmatpush1.bf16.xpose.msra.mxu0 0
    %354 = vmatprep.subr.bf16.mxu0 0
    %355 = vmatpush1.bf16.xpose.msra.mxu0 0
    %356 = vmatprep.subr.bf16.mxu0 0
    %357 = vmatpush1.bf16.xpose.msra.mxu0 0
    %358 = vmatprep.mubr.bf16.mxu0 0
    %359 = vmatmul.mubr.bf16.gmra.mrb[0].mxu0 %v321
    %v360 = vpop.f32.mrb[0].mxu0
    %v361 = vadd.f32 0.0, %v360
    %v362 = vpop.f32.mrb[0].mxu0
    %v363 = vpop.f32.mrb[0].mxu0
    %v364 = vpop.f32.mrb[0].mxu0
    %365 = vdwg.mxu0
    %366 = vrot.lane.b32.xlu0 %v245, 96
    %v367 = vpop.permute.xlu0 %366
    %v369 = vsel %vm271, %v245, 0
    %v372 = vsel %vm271, %v367, 0
    %374 = vmatprep.subr.bf16.mxu0 0
    %375 = vmatpush1.bf16.xpose.msra.mxu0 %v372
    %376 = vmatprep.subr.bf16.mxu0 0
    %377 = vmatpush1.bf16.xpose.msra.mxu0 0
    %378 = vmatprep.subr.bf16.mxu0 0
    %379 = vmatpush1.bf16.xpose.msra.mxu0 0
    %380 = vmatprep.subr.bf16.mxu0 0
    %381 = vmatpush1.bf16.xpose.msra.mxu0 0
    %382 = vmatprep.subr.bf16.mxu0 0
    %383 = vmatpush1.bf16.xpose.msra.mxu0 0
    %384 = vmatprep.subr.bf16.mxu0 0
    %385 = vmatpush1.bf16.xpose.msra.mxu0 0
    %386 = vmatprep.subr.bf16.mxu0 0
    %387 = vmatpush1.bf16.xpose.msra.mxu0 0
    %388 = vmatprep.subr.bf16.mxu0 0
    %389 = vmatpush1.bf16.xpose.msra.mxu0 0
    %390 = vmatprep.subr.bf16.mxu0 0
    %391 = vmatpush1.bf16.xpose.msra.mxu0 0
    %392 = vmatprep.subr.bf16.mxu0 0
    %393 = vmatpush1.bf16.xpose.msra.mxu0 0
    %394 = vmatprep.subr.bf16.mxu0 0
    %395 = vmatpush1.bf16.xpose.msra.mxu0 0
    %396 = vmatprep.subr.bf16.mxu0 0
    %397 = vmatpush1.bf16.xpose.msra.mxu0 0
    %398 = vmatprep.subr.bf16.mxu0 0
    %399 = vmatpush1.bf16.xpose.msra.mxu0 0
    %400 = vmatprep.subr.bf16.mxu0 0
    %401 = vmatpush1.bf16.xpose.msra.mxu0 0
    %402 = vmatprep.subr.bf16.mxu0 0
    %403 = vmatpush1.bf16.xpose.msra.mxu0 0
    %404 = vmatprep.subr.bf16.mxu0 0
    %405 = vmatpush1.bf16.xpose.msra.mxu0 0
    %406 = vmatprep.mubr.bf16.mxu0 0
    %407 = vmatmul.mubr.bf16.gmra.mrb[0].mxu0 %v369
    %v408 = vpop.f32.mrb[0].mxu0
    %v409 = vadd.f32 0.0, %v408
    %v410 = vpop.f32.mrb[0].mxu0
    %v411 = vpop.f32.mrb[0].mxu0
    %v412 = vpop.f32.mrb[0].mxu0
    %413 = vdwg.mxu0
    %414 = vrot.lane.b32.xlu0 %v247, 96
    %v415 = vpop.permute.xlu0 %414
    %v417 = vsel %vm271, %v247, 0
    %v420 = vsel %vm271, %v415, 0
    %422 = vmatprep.subr.bf16.mxu0 0
    %423 = vmatpush1.bf16.xpose.msra.mxu0 %v420
    %424 = vmatprep.subr.bf16.mxu0 0
    %425 = vmatpush1.bf16.xpose.msra.mxu0 0
    %426 = vmatprep.subr.bf16.mxu0 0
    %427 = vmatpush1.bf16.xpose.msra.mxu0 0
    %428 = vmatprep.subr.bf16.mxu0 0
    %429 = vmatpush1.bf16.xpose.msra.mxu0 0
    %430 = vmatprep.subr.bf16.mxu0 0
    %431 = vmatpush1.bf16.xpose.msra.mxu0 0
    %432 = vmatprep.subr.bf16.mxu0 0
    %433 = vmatpush1.bf16.xpose.msra.mxu0 0
    %434 = vmatprep.subr.bf16.mxu0 0
    %435 = vmatpush1.bf16.xpose.msra.mxu0 0
    %436 = vmatprep.subr.bf16.mxu0 0
    %437 = vmatpush1.bf16.xpose.msra.mxu0 0
    %438 = vmatprep.subr.bf16.mxu0 0
    %439 = vmatpush1.bf16.xpose.msra.mxu0 0
    %440 = vmatprep.subr.bf16.mxu0 0
    %441 = vmatpush1.bf16.xpose.msra.mxu0 0
    %442 = vmatprep.subr.bf16.mxu0 0
    %443 = vmatpush1.bf16.xpose.msra.mxu0 0
    %444 = vmatprep.subr.bf16.mxu0 0
    %445 = vmatpush1.bf16.xpose.msra.mxu0 0
    %446 = vmatprep.subr.bf16.mxu0 0
    %447 = vmatpush1.bf16.xpose.msra.mxu0 0
    %448 = vmatprep.subr.bf16.mxu0 0
    %449 = vmatpush1.bf16.xpose.msra.mxu0 0
    %450 = vmatprep.subr.bf16.mxu0 0
    %451 = vmatpush1.bf16.xpose.msra.mxu0 0
    %452 = vmatprep.subr.bf16.mxu0 0
    %453 = vmatpush1.bf16.xpose.msra.mxu0 0
    %454 = vmatprep.mubr.bf16.mxu0 0
    %455 = vmatmul.mubr.bf16.gmra.mrb[0].mxu0 %v417
    %v456 = vpop.f32.mrb[0].mxu0
    %v457 = vadd.f32 0.0, %v456
    %v458 = vpop.f32.mrb[0].mxu0
    %v459 = vpop.f32.mrb[0].mxu0
    %v460 = vpop.f32.mrb[0].mxu0
    %461 = vdwg.mxu0
    %462 = vrot.lane.b32.xlu0 %v248, 96
    %v463 = vpop.permute.xlu0 %462
    %v465 = vsel %vm271, %v248, 0
    %v468 = vsel %vm271, %v463, 0
    %470 = vmatprep.subr.bf16.mxu0 0
    %471 = vmatpush1.bf16.xpose.msra.mxu0 %v468
    %472 = vmatprep.subr.bf16.mxu0 0
    %473 = vmatpush1.bf16.xpose.msra.mxu0 0
    %474 = vmatprep.subr.bf16.mxu0 0
    %475 = vmatpush1.bf16.xpose.msra.mxu0 0
    %476 = vmatprep.subr.bf16.mxu0 0
    %477 = vmatpush1.bf16.xpose.msra.mxu0 0
    %478 = vmatprep.subr.bf16.mxu0 0
    %479 = vmatpush1.bf16.xpose.msra.mxu0 0
    %480 = vmatprep.subr.bf16.mxu0 0
    %481 = vmatpush1.bf16.xpose.msra.mxu0 0
    %482 = vmatprep.subr.bf16.mxu0 0
    %483 = vmatpush1.bf16.xpose.msra.mxu0 0
    %484 = vmatprep.subr.bf16.mxu0 0
    %485 = vmatpush1.bf16.xpose.msra.mxu0 0
    %486 = vmatprep.subr.bf16.mxu0 0
    %487 = vmatpush1.bf16.xpose.msra.mxu0 0
    %488 = vmatprep.subr.bf16.mxu0 0
    %489 = vmatpush1.bf16.xpose.msra.mxu0 0
    %490 = vmatprep.subr.bf16.mxu0 0
    %491 = vmatpush1.bf16.xpose.msra.mxu0 0
    %492 = vmatprep.subr.bf16.mxu0 0
    %493 = vmatpush1.bf16.xpose.msra.mxu0 0
    %494 = vmatprep.subr.bf16.mxu0 0
    %495 = vmatpush1.bf16.xpose.msra.mxu0 0
    %496 = vmatprep.subr.bf16.mxu0 0
    %497 = vmatpush1.bf16.xpose.msra.mxu0 0
    %498 = vmatprep.subr.bf16.mxu0 0
    %499 = vmatpush1.bf16.xpose.msra.mxu0 0
    %500 = vmatprep.subr.bf16.mxu0 0
    %501 = vmatpush1.bf16.xpose.msra.mxu0 0
    %502 = vmatprep.mubr.bf16.mxu0 0
    %503 = vmatmul.mubr.bf16.gmra.mrb[0].mxu0 %v465
    %v504 = vpop.f32.mrb[0].mxu0
    %v505 = vadd.f32 0.0, %v504
    %v506 = vpop.f32.mrb[0].mxu0
    %v507 = vpop.f32.mrb[0].mxu0
    %v508 = vpop.f32.mrb[0].mxu0
    %509 = vdwg.mxu0
    %510 = vrot.lane.b32.xlu0 %v250, 96
    %v511 = vpop.permute.xlu0 %510
    %v513 = vsel %vm271, %v250, 0
    %v516 = vsel %vm271, %v511, 0
    %518 = vmatprep.subr.bf16.mxu0 0
    %519 = vmatpush1.bf16.xpose.msra.mxu0 %v516
    %520 = vmatprep.subr.bf16.mxu0 0
    %521 = vmatpush1.bf16.xpose.msra.mxu0 0
    %522 = vmatprep.subr.bf16.mxu0 0
    %523 = vmatpush1.bf16.xpose.msra.mxu0 0
    %524 = vmatprep.subr.bf16.mxu0 0
    %525 = vmatpush1.bf16.xpose.msra.mxu0 0
    %526 = vmatprep.subr.bf16.mxu0 0
    %527 = vmatpush1.bf16.xpose.msra.mxu0 0
    %528 = vmatprep.subr.bf16.mxu0 0
    %529 = vmatpush1.bf16.xpose.msra.mxu0 0
    %530 = vmatprep.subr.bf16.mxu0 0
    %531 = vmatpush1.bf16.xpose.msra.mxu0 0
    %532 = vmatprep.subr.bf16.mxu0 0
    %533 = vmatpush1.bf16.xpose.msra.mxu0 0
    %534 = vmatprep.subr.bf16.mxu0 0
    %535 = vmatpush1.bf16.xpose.msra.mxu0 0
    %536 = vmatprep.subr.bf16.mxu0 0
    %537 = vmatpush1.bf16.xpose.msra.mxu0 0
    %538 = vmatprep.subr.bf16.mxu0 0
    %539 = vmatpush1.bf16.xpose.msra.mxu0 0
    %540 = vmatprep.subr.bf16.mxu0 0
    %541 = vmatpush1.bf16.xpose.msra.mxu0 0
    %542 = vmatprep.subr.bf16.mxu0 0
    %543 = vmatpush1.bf16.xpose.msra.mxu0 0
    %544 = vmatprep.subr.bf16.mxu0 0
    %545 = vmatpush1.bf16.xpose.msra.mxu0 0
    %546 = vmatprep.subr.bf16.mxu0 0
    %547 = vmatpush1.bf16.xpose.msra.mxu0 0
    %548 = vmatprep.subr.bf16.mxu0 0
    %549 = vmatpush1.bf16.xpose.msra.mxu0 0
    %550 = vmatprep.mubr.bf16.mxu0 0
    %551 = vmatmul.mubr.bf16.gmra.mrb[0].mxu0 %v513
    %v552 = vpop.f32.mrb[0].mxu0
    %v553 = vadd.f32 0.0, %v552
    %v554 = vpop.f32.mrb[0].mxu0
    %v555 = vpop.f32.mrb[0].mxu0
    %v556 = vpop.f32.mrb[0].mxu0
    %557 = vdwg.mxu0
    %558 = vrot.lane.b32.xlu0 %v252, 96
    %v559 = vpop.permute.xlu0 %558
    %v561 = vsel %vm271, %v252, 0
    %v564 = vsel %vm271, %v559, 0
    %566 = vmatprep.subr.bf16.mxu0 0
    %567 = vmatpush1.bf16.xpose.msra.mxu0 %v564
    %568 = vmatprep.subr.bf16.mxu0 0
    %569 = vmatpush1.bf16.xpose.msra.mxu0 0
    %570 = vmatprep.subr.bf16.mxu0 0
    %571 = vmatpush1.bf16.xpose.msra.mxu0 0
    %572 = vmatprep.subr.bf16.mxu0 0
    %573 = vmatpush1.bf16.xpose.msra.mxu0 0
    %574 = vmatprep.subr.bf16.mxu0 0
    %575 = vmatpush1.bf16.xpose.msra.mxu0 0
    %576 = vmatprep.subr.bf16.mxu0 0
    %577 = vmatpush1.bf16.xpose.msra.mxu0 0
    %578 = vmatprep.subr.bf16.mxu0 0
    %579 = vmatpush1.bf16.xpose.msra.mxu0 0
    %580 = vmatprep.subr.bf16.mxu0 0
    %581 = vmatpush1.bf16.xpose.msra.mxu0 0
    %582 = vmatprep.subr.bf16.mxu0 0
    %583 = vmatpush1.bf16.xpose.msra.mxu0 0
    %584 = vmatprep.subr.bf16.mxu0 0
    %585 = vmatpush1.bf16.xpose.msra.mxu0 0
    %586 = vmatprep.subr.bf16.mxu0 0
    %587 = vmatpush1.bf16.xpose.msra.mxu0 0
    %588 = vmatprep.subr.bf16.mxu0 0
    %589 = vmatpush1.bf16.xpose.msra.mxu0 0
    %590 = vmatprep.subr.bf16.mxu0 0
    %591 = vmatpush1.bf16.xpose.msra.mxu0 0
    %592 = vmatprep.subr.bf16.mxu0 0
    %593 = vmatpush1.bf16.xpose.msra.mxu0 0
    %594 = vmatprep.subr.bf16.mxu0 0
    %595 = vmatpush1.bf16.xpose.msra.mxu0 0
    %596 = vmatprep.subr.bf16.mxu0 0
    %597 = vmatpush1.bf16.xpose.msra.mxu0 0
    %598 = vmatprep.mubr.bf16.mxu0 0
    %599 = vmatmul.mubr.bf16.gmra.mrb[0].mxu0 %v561
    %v600 = vpop.f32.mrb[0].mxu0
    %v601 = vadd.f32 0.0, %v600
    %v602 = vpop.f32.mrb[0].mxu0
    %v603 = vpop.f32.mrb[0].mxu0
    %v604 = vpop.f32.mrb[0].mxu0
    %605 = vdwg.mxu0
    %606 = vrot.lane.b32.xlu0 %v254, 96
    %v607 = vpop.permute.xlu0 %606
    %v609 = vsel %vm271, %v254, 0
    %v612 = vsel %vm271, %v607, 0
    %614 = vmatprep.subr.bf16.mxu0 0
    %615 = vmatpush1.bf16.xpose.msra.mxu0 %v612
    %616 = vmatprep.subr.bf16.mxu0 0
    %617 = vmatpush1.bf16.xpose.msra.mxu0 0
    %618 = vmatprep.subr.bf16.mxu0 0
    %619 = vmatpush1.bf16.xpose.msra.mxu0 0
    %620 = vmatprep.subr.bf16.mxu0 0
    %621 = vmatpush1.bf16.xpose.msra.mxu0 0
    %622 = vmatprep.subr.bf16.mxu0 0
    %623 = vmatpush1.bf16.xpose.msra.mxu0 0
    %624 = vmatprep.subr.bf16.mxu0 0
    %625 = vmatpush1.bf16.xpose.msra.mxu0 0
    %626 = vmatprep.subr.bf16.mxu0 0
    %627 = vmatpush1.bf16.xpose.msra.mxu0 0
    %628 = vmatprep.subr.bf16.mxu0 0
    %629 = vmatpush1.bf16.xpose.msra.mxu0 0
    %630 = vmatprep.subr.bf16.mxu0 0
    %631 = vmatpush1.bf16.xpose.msra.mxu0 0
    %632 = vmatprep.subr.bf16.mxu0 0
    %633 = vmatpush1.bf16.xpose.msra.mxu0 0
    %634 = vmatprep.subr.bf16.mxu0 0
    %635 = vmatpush1.bf16.xpose.msra.mxu0 0
    %636 = vmatprep.subr.bf16.mxu0 0
    %637 = vmatpush1.bf16.xpose.msra.mxu0 0
    %638 = vmatprep.subr.bf16.mxu0 0
    %639 = vmatpush1.bf16.xpose.msra.mxu0 0
    %640 = vmatprep.subr.bf16.mxu0 0
    %641 = vmatpush1.bf16.xpose.msra.mxu0 0
    %642 = vmatprep.subr.bf16.mxu0 0
    %643 = vmatpush1.bf16.xpose.msra.mxu0 0
    %644 = vmatprep.subr.bf16.mxu0 0
    %645 = vmatpush1.bf16.xpose.msra.mxu0 0
    %646 = vmatprep.mubr.bf16.mxu0 0
    %647 = vmatmul.mubr.bf16.gmra.mrb[0].mxu0 %v609
    %v648 = vpop.f32.mrb[0].mxu0
    %v649 = vadd.f32 0.0, %v648
    %v650 = vpop.f32.mrb[0].mxu0
    %v651 = vpop.f32.mrb[0].mxu0
    %v652 = vpop.f32.mrb[0].mxu0
    %653 = vdwg.mxu0
    %v654 = vsel %vm271, %v313, -inf
    %655 = vmax.xlane.f32.xlu0 %v654
    %v656 = vpop.xlane.xlu0 %655
    %v657 = vsel %vm271, %v361, -inf
    %658 = vmax.xlane.f32.xlu0 %v657
    %v659 = vpop.xlane.xlu0 %658
    %v660 = vsel %vm271, %v409, -inf
    %661 = vmax.xlane.f32.xlu0 %v660
    %v662 = vpop.xlane.xlu0 %661
    %v663 = vsel %vm271, %v457, -inf
    %664 = vmax.xlane.f32.xlu0 %v663
    %v665 = vpop.xlane.xlu0 %664
    %v666 = vsel %vm271, %v505, -inf
    %667 = vmax.xlane.f32.xlu0 %v666
    %v668 = vpop.xlane.xlu0 %667
    %v669 = vsel %vm271, %v553, -inf
    %670 = vmax.xlane.f32.xlu0 %v669
    %v671 = vpop.xlane.xlu0 %670
    %v672 = vsel %vm271, %v601, -inf
    %673 = vmax.xlane.f32.xlu0 %v672
    %v674 = vpop.xlane.xlu0 %673
    %v675 = vsel %vm271, %v649, -inf
    %676 = vmax.xlane.f32.xlu0 %v675
    %v677 = vpop.xlane.xlu0 %676
    %v678 = vsub.f32 %v313, %v656
    %v679 = vsub.f32 %v361, %v659
    %v680 = vsub.f32 %v409, %v662
    %v681 = vsub.f32 %v457, %v665
    %v682 = vsub.f32 %v505, %v668
    %v683 = vsub.f32 %v553, %v671
    %v684 = vsub.f32 %v601, %v674
    %v685 = vsub.f32 %v649, %v677
    %v686 = vmul.f32 %v678, 1.442695
    %v687 = vpow.pop %v686
    %v688 = vmul.f32 %v679, 1.442695
    %v689 = vpow.pop %v688
    %v690 = vmul.f32 %v680, 1.442695
    %v691 = vpow.pop %v690
    %v692 = vmul.f32 %v681, 1.442695
    %v693 = vpow.pop %v692
    %v694 = vmul.f32 %v682, 1.442695
    %v695 = vpow.pop %v694
    %v696 = vmul.f32 %v683, 1.442695
    %v697 = vpow.pop %v696
    %v698 = vmul.f32 %v684, 1.442695
    %v699 = vpow.pop %v698
    %v700 = vmul.f32 %v685, 1.442695
    %v701 = vpow.pop %v700
    %v702 = vsel %vm271, %v687, 0.0
    %703 = vadd.xlane.f32.xlu0 %v702
    %v704 = vpop.xlane.xlu0 %703
    %v705 = vsel %vm271, %v689, 0.0
    %706 = vadd.xlane.f32.xlu0 %v705
    %v707 = vpop.xlane.xlu0 %706
    %v708 = vsel %vm271, %v691, 0.0
    %709 = vadd.xlane.f32.xlu0 %v708
    %v710 = vpop.xlane.xlu0 %709
    %v711 = vsel %vm271, %v693, 0.0
    %712 = vadd.xlane.f32.xlu0 %v711
    %v713 = vpop.xlane.xlu0 %712
    %v714 = vsel %vm271, %v695, 0.0
    %715 = vadd.xlane.f32.xlu0 %v714
    %v716 = vpop.xlane.xlu0 %715
    %v717 = vsel %vm271, %v697, 0.0
    %718 = vadd.xlane.f32.xlu0 %v717
    %v719 = vpop.xlane.xlu0 %718
    %v720 = vsel %vm271, %v699, 0.0
    %721 = vadd.xlane.f32.xlu0 %v720
    %v722 = vpop.xlane.xlu0 %721
    %v723 = vsel %vm271, %v701, 0.0
    %724 = vadd.xlane.f32.xlu0 %v723
    %v725 = vpop.xlane.xlu0 %724
    %v726 = vrcp.pop %v704
    %v727 = vrcp.pop %v707
    %v728 = vrcp.pop %v710
    %v729 = vrcp.pop %v713
    %v730 = vrcp.pop %v716
    %v731 = vrcp.pop %v719
    %v732 = vrcp.pop %v722
    %v733 = vrcp.pop %v725
    %v734 = vmul.f32 %v687, %v726
    %v735 = vmul.f32 %v689, %v727
    %v736 = vmul.f32 %v691, %v728
    %v737 = vmul.f32 %v693, %v729
    %v738 = vmul.f32 %v695, %v730
    %v739 = vmul.f32 %v697, %v731
    %v740 = vmul.f32 %v699, %v732
    %v741 = vmul.f32 %v701, %v733
    %v742 = vpack.c.bf16 %v734, %v734
    %v743 = vpack.c.bf16 %v735, %v735
    %v744 = vpack.c.bf16 %v736, %v736
    %v745 = vpack.c.bf16 %v737, %v737
    %v746 = vpack.c.bf16 %v738, %v738
    %v747 = vpack.c.bf16 %v739, %v739
    %v748 = vpack.c.bf16 %v740, %v740
    %v749 = vpack.c.bf16 %v741, %v741
    %v751 = vsel %vm271, %v742, 0
    %vm753 = vcmask 1043456
    %v755 = vsel %vm753, %v240, 0
    %757 = vmatprep.subr.bf16.mxu0 0
    %758 = vmatpush1.bf16.msra.mxu0 %v755
    %759 = vmatprep.subr.bf16.mxu0 0
    %760 = vmatpush1.bf16.msra.mxu0 0
    %761 = vmatprep.subr.bf16.mxu0 0
    %762 = vmatpush1.bf16.msra.mxu0 0
    %763 = vmatprep.subr.bf16.mxu0 0
    %764 = vmatpush1.bf16.msra.mxu0 0
    %765 = vmatprep.subr.bf16.mxu0 0
    %766 = vmatpush1.bf16.msra.mxu0 0
    %767 = vmatprep.subr.bf16.mxu0 0
    %768 = vmatpush1.bf16.msra.mxu0 0
    %769 = vmatprep.subr.bf16.mxu0 0
    %770 = vmatpush1.bf16.msra.mxu0 0
    %771 = vmatprep.subr.bf16.mxu0 0
    %772 = vmatpush1.bf16.msra.mxu0 0
    %773 = vmatprep.subr.bf16.mxu0 0
    %774 = vmatpush1.bf16.msra.mxu0 0
    %775 = vmatprep.subr.bf16.mxu0 0
    %776 = vmatpush1.bf16.msra.mxu0 0
    %777 = vmatprep.subr.bf16.mxu0 0
    %778 = vmatpush1.bf16.msra.mxu0 0
    %779 = vmatprep.subr.bf16.mxu0 0
    %780 = vmatpush1.bf16.msra.mxu0 0
    %781 = vmatprep.subr.bf16.mxu0 0
    %782 = vmatpush1.bf16.msra.mxu0 0
    %783 = vmatprep.subr.bf16.mxu0 0
    %784 = vmatpush1.bf16.msra.mxu0 0
    %785 = vmatprep.subr.bf16.mxu0 0
    %786 = vmatpush1.bf16.msra.mxu0 0
    %787 = vmatprep.subr.bf16.mxu0 0
    %788 = vmatpush1.bf16.msra.mxu0 0
    %789 = vmatprep.mubr.bf16.mxu0 0
    %790 = vmatmul.mubr.bf16.gmra.mrb[0].mxu0 %v751
    %v791 = vpop.f32.mrb[0].mxu0
    %v792 = vadd.f32 0.0, %v791
    %v793 = vpop.f32.mrb[0].mxu0
    %v794 = vpop.f32.mrb[0].mxu0
    %v795 = vpop.f32.mrb[0].mxu0
    %796 = vdwg.mxu0
    %v798 = vsel %vm271, %v743, 0
    %v801 = vsel %vm753, %v257, 0
    %803 = vmatprep.subr.bf16.mxu0 0
    %804 = vmatpush1.bf16.msra.mxu0 %v801
    %805 = vmatprep.subr.bf16.mxu0 0
    %806 = vmatpush1.bf16.msra.mxu0 0
    %807 = vmatprep.subr.bf16.mxu0 0
    %808 = vmatpush1.bf16.msra.mxu0 0
    %809 = vmatprep.subr.bf16.mxu0 0
    %810 = vmatpush1.bf16.msra.mxu0 0
    %811 = vmatprep.subr.bf16.mxu0 0
    %812 = vmatpush1.bf16.msra.mxu0 0
    %813 = vmatprep.subr.bf16.mxu0 0
    %814 = vmatpush1.bf16.msra.mxu0 0
    %815 = vmatprep.subr.bf16.mxu0 0
    %816 = vmatpush1.bf16.msra.mxu0 0
    %817 = vmatprep.subr.bf16.mxu0 0
    %818 = vmatpush1.bf16.msra.mxu0 0
    %819 = vmatprep.subr.bf16.mxu0 0
    %820 = vmatpush1.bf16.msra.mxu0 0
    %821 = vmatprep.subr.bf16.mxu0 0
    %822 = vmatpush1.bf16.msra.mxu0 0
    %823 = vmatprep.subr.bf16.mxu0 0
    %824 = vmatpush1.bf16.msra.mxu0 0
    %825 = vmatprep.subr.bf16.mxu0 0
    %826 = vmatpush1.bf16.msra.mxu0 0
    %827 = vmatprep.subr.bf16.mxu0 0
    %828 = vmatpush1.bf16.msra.mxu0 0
    %829 = vmatprep.subr.bf16.mxu0 0
    %830 = vmatpush1.bf16.msra.mxu0 0
    %831 = vmatprep.subr.bf16.mxu0 0
    %832 = vmatpush1.bf16.msra.mxu0 0
    %833 = vmatprep.subr.bf16.mxu0 0
    %834 = vmatpush1.bf16.msra.mxu0 0
    %835 = vmatprep.mubr.bf16.mxu0 0
    %836 = vmatmul.mubr.bf16.gmra.mrb[0].mxu0 %v798
    %v837 = vpop.f32.mrb[0].mxu0
    %v838 = vadd.f32 0.0, %v837
    %v839 = vpop.f32.mrb[0].mxu0
    %v840 = vpop.f32.mrb[0].mxu0
    %v841 = vpop.f32.mrb[0].mxu0
    %842 = vdwg.mxu0
    %v844 = vsel %vm271, %v744, 0
    %v847 = vsel %vm753, %v259, 0
    %849 = vmatprep.subr.bf16.mxu0 0
    %850 = vmatpush1.bf16.msra.mxu0 %v847
    %851 = vmatprep.subr.bf16.mxu0 0
    %852 = vmatpush1.bf16.msra.mxu0 0
    %853 = vmatprep.subr.bf16.mxu0 0
    %854 = vmatpush1.bf16.msra.mxu0 0
    %855 = vmatprep.subr.bf16.mxu0 0
    %856 = vmatpush1.bf16.msra.mxu0 0
    %857 = vmatprep.subr.bf16.mxu0 0
    %858 = vmatpush1.bf16.msra.mxu0 0
    %859 = vmatprep.subr.bf16.mxu0 0
    %860 = vmatpush1.bf16.msra.mxu0 0
    %861 = vmatprep.subr.bf16.mxu0 0
    %862 = vmatpush1.bf16.msra.mxu0 0
    %863 = vmatprep.subr.bf16.mxu0 0
    %864 = vmatpush1.bf16.msra.mxu0 0
    %865 = vmatprep.subr.bf16.mxu0 0
    %866 = vmatpush1.bf16.msra.mxu0 0
    %867 = vmatprep.subr.bf16.mxu0 0
    %868 = vmatpush1.bf16.msra.mxu0 0
    %869 = vmatprep.subr.bf16.mxu0 0
    %870 = vmatpush1.bf16.msra.mxu0 0
    %871 = vmatprep.subr.bf16.mxu0 0
    %872 = vmatpush1.bf16.msra.mxu0 0
    %873 = vmatprep.subr.bf16.mxu0 0
    %874 = vmatpush1.bf16.msra.mxu0 0
    %875 = vmatprep.subr.bf16.mxu0 0
    %876 = vmatpush1.bf16.msra.mxu0 0
    %877 = vmatprep.subr.bf16.mxu0 0
    %878 = vmatpush1.bf16.msra.mxu0 0
    %879 = vmatprep.subr.bf16.mxu0 0
    %880 = vmatpush1.bf16.msra.mxu0 0
    %881 = vmatprep.mubr.bf16.mxu0 0
    %882 = vmatmul.mubr.bf16.gmra.mrb[0].mxu0 %v844
    %v883 = vpop.f32.mrb[0].mxu0
    %v884 = vadd.f32 0.0, %v883
    %v885 = vpop.f32.mrb[0].mxu0
    %v886 = vpop.f32.mrb[0].mxu0
    %v887 = vpop.f32.mrb[0].mxu0
    %888 = vdwg.mxu0
    %v890 = vsel %vm271, %v745, 0
    %v893 = vsel %vm753, %v261, 0
    %895 = vmatprep.subr.bf16.mxu0 0
    %896 = vmatpush1.bf16.msra.mxu0 %v893
    %897 = vmatprep.subr.bf16.mxu0 0
    %898 = vmatpush1.bf16.msra.mxu0 0
    %899 = vmatprep.subr.bf16.mxu0 0
    %900 = vmatpush1.bf16.msra.mxu0 0
    %901 = vmatprep.subr.bf16.mxu0 0
    %902 = vmatpush1.bf16.msra.mxu0 0
    %903 = vmatprep.subr.bf16.mxu0 0
    %904 = vmatpush1.bf16.msra.mxu0 0
    %905 = vmatprep.subr.bf16.mxu0 0
    %906 = vmatpush1.bf16.msra.mxu0 0
    %907 = vmatprep.subr.bf16.mxu0 0
    %908 = vmatpush1.bf16.msra.mxu0 0
    %909 = vmatprep.subr.bf16.mxu0 0
    %910 = vmatpush1.bf16.msra.mxu0 0
    %911 = vmatprep.subr.bf16.mxu0 0
    %912 = vmatpush1.bf16.msra.mxu0 0
    %913 = vmatprep.subr.bf16.mxu0 0
    %914 = vmatpush1.bf16.msra.mxu0 0
    %915 = vmatprep.subr.bf16.mxu0 0
    %916 = vmatpush1.bf16.msra.mxu0 0
    %917 = vmatprep.subr.bf16.mxu0 0
    %918 = vmatpush1.bf16.msra.mxu0 0
    %919 = vmatprep.subr.bf16.mxu0 0
    %920 = vmatpush1.bf16.msra.mxu0 0
    %921 = vmatprep.subr.bf16.mxu0 0
    %922 = vmatpush1.bf16.msra.mxu0 0
    %923 = vmatprep.subr.bf16.mxu0 0
    %924 = vmatpush1.bf16.msra.mxu0 0
    %925 = vmatprep.subr.bf16.mxu0 0
    %926 = vmatpush1.bf16.msra.mxu0 0
    %927 = vmatprep.mubr.bf16.mxu0 0
    %928 = vmatmul.mubr.bf16.gmra.mrb[0].mxu0 %v890
    %v929 = vpop.f32.mrb[0].mxu0
    %v930 = vadd.f32 0.0, %v929
    %v931 = vpop.f32.mrb[0].mxu0
    %v932 = vpop.f32.mrb[0].mxu0
    %v933 = vpop.f32.mrb[0].mxu0
    %934 = vdwg.mxu0
    %v936 = vsel %vm271, %v746, 0
    %v939 = vsel %vm753, %v262, 0
    %941 = vmatprep.subr.bf16.mxu0 0
    %942 = vmatpush1.bf16.msra.mxu0 %v939
    %943 = vmatprep.subr.bf16.mxu0 0
    %944 = vmatpush1.bf16.msra.mxu0 0
    %945 = vmatprep.subr.bf16.mxu0 0
    %946 = vmatpush1.bf16.msra.mxu0 0
    %947 = vmatprep.subr.bf16.mxu0 0
    %948 = vmatpush1.bf16.msra.mxu0 0
    %949 = vmatprep.subr.bf16.mxu0 0
    %950 = vmatpush1.bf16.msra.mxu0 0
    %951 = vmatprep.subr.bf16.mxu0 0
    %952 = vmatpush1.bf16.msra.mxu0 0
    %953 = vmatprep.subr.bf16.mxu0 0
    %954 = vmatpush1.bf16.msra.mxu0 0
    %955 = vmatprep.subr.bf16.mxu0 0
    %956 = vmatpush1.bf16.msra.mxu0 0
    %957 = vmatprep.subr.bf16.mxu0 0
    %958 = vmatpush1.bf16.msra.mxu0 0
    %959 = vmatprep.subr.bf16.mxu0 0
    %960 = vmatpush1.bf16.msra.mxu0 0
    %961 = vmatprep.subr.bf16.mxu0 0
    %962 = vmatpush1.bf16.msra.mxu0 0
    %963 = vmatprep.subr.bf16.mxu0 0
    %964 = vmatpush1.bf16.msra.mxu0 0
    %965 = vmatprep.subr.bf16.mxu0 0
    %966 = vmatpush1.bf16.msra.mxu0 0
    %967 = vmatprep.subr.bf16.mxu0 0
    %968 = vmatpush1.bf16.msra.mxu0 0
    %969 = vmatprep.subr.bf16.mxu0 0
    %970 = vmatpush1.bf16.msra.mxu0 0
    %971 = vmatprep.subr.bf16.mxu0 0
    %972 = vmatpush1.bf16.msra.mxu0 0
    %973 = vmatprep.mubr.bf16.mxu0 0
    %974 = vmatmul.mubr.bf16.gmra.mrb[0].mxu0 %v936
    %v975 = vpop.f32.mrb[0].mxu0
    %v976 = vadd.f32 0.0, %v975
    %v977 = vpop.f32.mrb[0].mxu0
    %v978 = vpop.f32.mrb[0].mxu0
    %v979 = vpop.f32.mrb[0].mxu0
    %980 = vdwg.mxu0
    %v982 = vsel %vm271, %v747, 0
    %v985 = vsel %vm753, %v264, 0
    %987 = vmatprep.subr.bf16.mxu0 0
    %988 = vmatpush1.bf16.msra.mxu0 %v985
    %989 = vmatprep.subr.bf16.mxu0 0
    %990 = vmatpush1.bf16.msra.mxu0 0
    %991 = vmatprep.subr.bf16.mxu0 0
    %992 = vmatpush1.bf16.msra.mxu0 0
    %993 = vmatprep.subr.bf16.mxu0 0
    %994 = vmatpush1.bf16.msra.mxu0 0
    %995 = vmatprep.subr.bf16.mxu0 0
    %996 = vmatpush1.bf16.msra.mxu0 0
    %997 = vmatprep.subr.bf16.mxu0 0
    %998 = vmatpush1.bf16.msra.mxu0 0
    %999 = vmatprep.subr.bf16.mxu0 0
    %1000 = vmatpush1.bf16.msra.mxu0 0
    %1001 = vmatprep.subr.bf16.mxu0 0
    %1002 = vmatpush1.bf16.msra.mxu0 0
    %1003 = vmatprep.subr.bf16.mxu0 0
    %1004 = vmatpush1.bf16.msra.mxu0 0
    %1005 = vmatprep.subr.bf16.mxu0 0
    %1006 = vmatpush1.bf16.msra.mxu0 0
    %1007 = vmatprep.subr.bf16.mxu0 0
    %1008 = vmatpush1.bf16.msra.mxu0 0
    %1009 = vmatprep.subr.bf16.mxu0 0
    %1010 = vmatpush1.bf16.msra.mxu0 0
    %1011 = vmatprep.subr.bf16.mxu0 0
    %1012 = vmatpush1.bf16.msra.mxu0 0
    %1013 = vmatprep.subr.bf16.mxu0 0
    %1014 = vmatpush1.bf16.msra.mxu0 0
    %1015 = vmatprep.subr.bf16.mxu0 0
    %1016 = vmatpush1.bf16.msra.mxu0 0
    %1017 = vmatprep.subr.bf16.mxu0 0
    %1018 = vmatpush1.bf16.msra.mxu0 0
    %1019 = vmatprep.mubr.bf16.mxu0 0
    %1020 = vmatmul.mubr.bf16.gmra.mrb[0].mxu0 %v982
    %v1021 = vpop.f32.mrb[0].mxu0
    %v1022 = vadd.f32 0.0, %v1021
    %v1023 = vpop.f32.mrb[0].mxu0
    %v1024 = vpop.f32.mrb[0].mxu0
    %v1025 = vpop.f32.mrb[0].mxu0
    %1026 = vdwg.mxu0
    %v1028 = vsel %vm271, %v748, 0
    %v1031 = vsel %vm753, %v266, 0
    %1033 = vmatprep.subr.bf16.mxu0 0
    %1034 = vmatpush1.bf16.msra.mxu0 %v1031
    %1035 = vmatprep.subr.bf16.mxu0 0
    %1036 = vmatpush1.bf16.msra.mxu0 0
    %1037 = vmatprep.subr.bf16.mxu0 0
    %1038 = vmatpush1.bf16.msra.mxu0 0
    %1039 = vmatprep.subr.bf16.mxu0 0
    %1040 = vmatpush1.bf16.msra.mxu0 0
    %1041 = vmatprep.subr.bf16.mxu0 0
    %1042 = vmatpush1.bf16.msra.mxu0 0
    %1043 = vmatprep.subr.bf16.mxu0 0
    %1044 = vmatpush1.bf16.msra.mxu0 0
    %1045 = vmatprep.subr.bf16.mxu0 0
    %1046 = vmatpush1.bf16.msra.mxu0 0
    %1047 = vmatprep.subr.bf16.mxu0 0
    %1048 = vmatpush1.bf16.msra.mxu0 0
    %1049 = vmatprep.subr.bf16.mxu0 0
    %1050 = vmatpush1.bf16.msra.mxu0 0
    %1051 = vmatprep.subr.bf16.mxu0 0
    %1052 = vmatpush1.bf16.msra.mxu0 0
    %1053 = vmatprep.subr.bf16.mxu0 0
    %1054 = vmatpush1.bf16.msra.mxu0 0
    %1055 = vmatprep.subr.bf16.mxu0 0
    %1056 = vmatpush1.bf16.msra.mxu0 0
    %1057 = vmatprep.subr.bf16.mxu0 0
    %1058 = vmatpush1.bf16.msra.mxu0 0
    %1059 = vmatprep.subr.bf16.mxu0 0
    %1060 = vmatpush1.bf16.msra.mxu0 0
    %1061 = vmatprep.subr.bf16.mxu0 0
    %1062 = vmatpush1.bf16.msra.mxu0 0
    %1063 = vmatprep.subr.bf16.mxu0 0
    %1064 = vmatpush1.bf16.msra.mxu0 0
    %1065 = vmatprep.mubr.bf16.mxu0 0
    %1066 = vmatmul.mubr.bf16.gmra.mrb[0].mxu0 %v1028
    %v1067 = vpop.f32.mrb[0].mxu0
    %v1068 = vadd.f32 0.0, %v1067
    %v1069 = vpop.f32.mrb[0].mxu0
    %v1070 = vpop.f32.mrb[0].mxu0
    %v1071 = vpop.f32.mrb[0].mxu0
    %1072 = vdwg.mxu0
    %v1074 = vsel %vm271, %v749, 0
    %v1077 = vsel %vm753, %v268, 0
    %1079 = vmatprep.subr.bf16.mxu0 0
    %1080 = vmatpush1.bf16.msra.mxu0 %v1077
    %1081 = vmatprep.subr.bf16.mxu0 0
    %1082 = vmatpush1.bf16.msra.mxu0 0
    %1083 = vmatprep.subr.bf16.mxu0 0
    %1084 = vmatpush1.bf16.msra.mxu0 0
    %1085 = vmatprep.subr.bf16.mxu0 0
    %1086 = vmatpush1.bf16.msra.mxu0 0
    %1087 = vmatprep.subr.bf16.mxu0 0
    %1088 = vmatpush1.bf16.msra.mxu0 0
    %1089 = vmatprep.subr.bf16.mxu0 0
    %1090 = vmatpush1.bf16.msra.mxu0 0
    %1091 = vmatprep.subr.bf16.mxu0 0
    %1092 = vmatpush1.bf16.msra.mxu0 0
    %1093 = vmatprep.subr.bf16.mxu0 0
    %1094 = vmatpush1.bf16.msra.mxu0 0
    %1095 = vmatprep.subr.bf16.mxu0 0
    %1096 = vmatpush1.bf16.msra.mxu0 0
    %1097 = vmatprep.subr.bf16.mxu0 0
    %1098 = vmatpush1.bf16.msra.mxu0 0
    %1099 = vmatprep.subr.bf16.mxu0 0
    %1100 = vmatpush1.bf16.msra.mxu0 0
    %1101 = vmatprep.subr.bf16.mxu0 0
    %1102 = vmatpush1.bf16.msra.mxu0 0
    %1103 = vmatprep.subr.bf16.mxu0 0
    %1104 = vmatpush1.bf16.msra.mxu0 0
    %1105 = vmatprep.subr.bf16.mxu0 0
    %1106 = vmatpush1.bf16.msra.mxu0 0
    %1107 = vmatprep.subr.bf16.mxu0 0
    %1108 = vmatpush1.bf16.msra.mxu0 0
    %1109 = vmatprep.subr.bf16.mxu0 0
    %1110 = vmatpush1.bf16.msra.mxu0 0
    %1111 = vmatprep.mubr.bf16.mxu0 0
    %1112 = vmatmul.mubr.bf16.gmra.mrb[0].mxu0 %v1074
    %v1113 = vpop.f32.mrb[0].mxu0
    %v1114 = vadd.f32 0.0, %v1113
    %v1115 = vpop.f32.mrb[0].mxu0
    %v1116 = vpop.f32.mrb[0].mxu0
    %v1117 = vpop.f32.mrb[0].mxu0
    %1118 = vdwg.mxu0
    %1120 = vrot.lane.b32.xlu0 %v838, 8
    %v1121 = vpop.permute.xlu0 %1120
    %1124 = vrot.lane.b32.xlu0 %v884, 16
    %v1125 = vpop.permute.xlu0 %1124
    %1128 = vrot.lane.b32.xlu0 %v930, 24
    %v1129 = vpop.permute.xlu0 %1128
    %v1131 = vsel %vm271, %v792, %v1121
    %vm1132 = vcmask 130048
    %v1133 = vsel %vm1132, %v1131, %v1125
    %vm1134 = vcmask 195584
    %v1135 = vsel %vm1134, %v1133, %v1129
    %1137 = vrot.lane.b32.xlu0 %v1022, 8
    %v1138 = vpop.permute.xlu0 %1137
    %1141 = vrot.lane.b32.xlu0 %v1068, 16
    %v1142 = vpop.permute.xlu0 %1141
    %1145 = vrot.lane.b32.xlu0 %v1114, 24
    %v1146 = vpop.permute.xlu0 %1145
    %v1148 = vsel %vm271, %v976, %v1138
    %v1149 = vsel %vm1132, %v1148, %v1142
    %v1150 = vsel %vm1134, %v1149, %v1146
    %v1151 = vpack.c.bf16 %v1150, %v1135
    %v1152 = vld [vmem:[#allocation5] sm:$0xf]
    %v1153 = vld [vmem:[#allocation5 + $0x4] sm:$0xf]
    %v1154 = vld [vmem:[#allocation5 + $0x8] sm:$0xf]
    %v1155 = vld [vmem:[#allocation5 + $0xc] sm:$0xf]
    %v1156 = vld [vmem:[%s7] sm:$0x1]
    %v1158 = vlaneseq
    %v1159 = vshrl.u32 %v1158, 7
    %v1160 = vsub.s32 0, %v1159
    %v1161 = vrot.slane %v1156, %v1160
    %v1167 = vunpack.c.l.b16 %v1152
    %v1168 = vunpack.c.l.b16 %v1153
    %v1169 = vunpack.c.l.b16 %v1154
    %v1170 = vunpack.c.l.b16 %v1155
    %v1171 = vpack.c.b16 %v1168, %v1167
    %v1172 = vpack.c.b16 %v1170, %v1169
    %v1176 = vsel %vm127, %v1151, 0
    %1178 = vmatprep.subr.bf16.mxu0 0
    %1179 = vmatpush1.bf16.msra.mxu0 %v1171
    %1180 = vmatprep.subr.bf16.mxu0 0
    %1181 = vmatpush1.bf16.msra.mxu0 %v1172
    %1182 = vmatprep.subr.bf16.mxu0 0
    %1183 = vmatpush1.bf16.msra.mxu0 0
    %1184 = vmatprep.subr.bf16.mxu0 0
    %1185 = vmatpush1.bf16.msra.mxu0 0
    %1186 = vmatprep.subr.bf16.mxu0 0
    %1187 = vmatpush1.bf16.msra.mxu0 0
    %1188 = vmatprep.subr.bf16.mxu0 0
    %1189 = vmatpush1.bf16.msra.mxu0 0
    %1190 = vmatprep.subr.bf16.mxu0 0
    %1191 = vmatpush1.bf16.msra.mxu0 0
    %1192 = vmatprep.subr.bf16.mxu0 0
    %1193 = vmatpush1.bf16.msra.mxu0 0
    %1194 = vmatprep.subr.bf16.mxu0 0
    %1195 = vmatpush1.bf16.msra.mxu0 0
    %1196 = vmatprep.subr.bf16.mxu0 0
    %1197 = vmatpush1.bf16.msra.mxu0 0
    %1198 = vmatprep.subr.bf16.mxu0 0
    %1199 = vmatpush1.bf16.msra.mxu0 0
    %1200 = vmatprep.subr.bf16.mxu0 0
    %1201 = vmatpush1.bf16.msra.mxu0 0
    %1202 = vmatprep.subr.bf16.mxu0 0
    %1203 = vmatpush1.bf16.msra.mxu0 0
    %1204 = vmatprep.subr.bf16.mxu0 0
    %1205 = vmatpush1.bf16.msra.mxu0 0
    %1206 = vmatprep.subr.bf16.mxu0 0
    %1207 = vmatpush1.bf16.msra.mxu0 0
    %1208 = vmatprep.subr.bf16.mxu0 0
    %1209 = vmatpush1.bf16.msra.mxu0 0
    %1210 = vmatprep.mubr.bf16.mxu0 0
    %1211 = vmatmul.mubr.bf16.gmra.mrb[0].mxu0 %v1176
    %v1212 = vpop.f32.mrb[0].mxu0
    %v1213 = vadd.f32 %v1161, %v1212
    %v1214 = vpop.f32.mrb[0].mxu0
    %v1215 = vpop.f32.mrb[0].mxu0
    %v1216 = vadd.f32 %v1161, %v1215
    %v1217 = vpop.f32.mrb[0].mxu0
    %1218 = vdwg.mxu0
    %v1219 = vadd.f32 %v96, %v1213
    %v1220 = vadd.f32 %v97, %v1216
    %v1221 = vsel %vm127, %v1219, 0.0
    %1222 = vadd.xlane.f32.xlu0 %v1221
    %v1223 = vpop.xlane.xlu0 %1222
    %v1224 = vsel %vm127, %v1220, 0.0
    %1225 = vadd.xlane.f32.xlu0 %v1224
    %v1226 = vpop.xlane.xlu0 %1225
    %v1227 = vrcp.pop 32.0
    %v1228 = vmul.f32 %v1223, %v1227
    %v1229 = vmul.f32 %v1226, %v1227
    %v1230 = vmul.f32 %v1219, %v1219
    %v1231 = vmul.f32 %v1220, %v1220
    %v1232 = vsel %vm127, %v1230, 0.0
    %1233 = vadd.xlane.f32.xlu0 %v1232
    %v1234 = vpop.xlane.xlu0 %1233
    %v1235 = vsel %vm127, %v1231, 0.0
    %1236 = vadd.xlane.f32.xlu0 %v1235
    %v1237 = vpop.xlane.xlu0 %1236
    %v1238 = vmul.f32 %v1234, %v1227
    %v1239 = vmul.f32 %v1237, %v1227
    %v1240 = vmul.f32 %v1228, %v1228
    %v1241 = vmul.f32 %v1229, %v1229
    %v1242 = vsub.f32 %v1238, %v1240
    %v1243 = vsub.f32 %v1239, %v1241
    %v1244 = vsub.f32 %v1219, %v1228
    %v1245 = vsub.f32 %v1220, %v1229
    %v1246 = vadd.f32 %v1242, 1e-05
    %v1247 = vadd.f32 %v1243, 1e-05
    %v1248 = vrsqrt.pop %v1246
    %v1249 = vrsqrt.pop %v1247
    %v1250 = vmul.f32 %v1244, %v1248
    %v1251 = vmul.f32 %v1245, %v1249
    %v1252 = vld [vmem:[%s12] sm:$0x1]
    %v1254 = vlaneseq
    %v1255 = vshrl.u32 %v1254, 7
    %v1256 = vsub.s32 0, %v1255
    %v1257 = vrot.slane %v1252, %v1256
    %v1259 = vmul.f32 %v1250, %v1257
    %v1260 = vmul.f32 %v1251, %v1257
    %v1261 = vld [vmem:[%s13] sm:$0x1]
    %v1263 = vlaneseq
    %v1264 = vshrl.u32 %v1263, 7
    %v1265 = vsub.s32 0, %v1264
    %v1266 = vrot.slane %v1261, %v1265
    %v1268 = vadd.f32 %v1259, %v1266
    %v1269 = vadd.f32 %v1260, %v1266
    %v1270 = vpack.c.bf16 %v1269, %v1268
    %v1271 = vld [vmem:[#allocation7] sm:$0xf]
    %v1272 = vld [vmem:[#allocation7 + $0x4] sm:$0xf]
    %v1273 = vld [vmem:[#allocation7 + $0x8] sm:$0xf]
    %v1274 = vld [vmem:[#allocation7 + $0xc] sm:$0xf]
    %v1275 = vld [vmem:[%s9] sm:$0x1]
    %v1277 = vlaneseq
    %v1278 = vshrl.u32 %v1277, 7
    %v1279 = vsub.s32 0, %v1278
    %v1280 = vrot.slane %v1275, %v1279
    %v1286 = vunpack.c.l.b16 %v1271
    %v1287 = vunpack.c.l.b16 %v1272
    %v1288 = vunpack.c.l.b16 %v1273
    %v1289 = vunpack.c.l.b16 %v1274
    %v1290 = vpack.c.b16 %v1287, %v1286
    %v1291 = vpack.c.b16 %v1289, %v1288
    %v1295 = vsel %vm127, %v1270, 0
    %1297 = vmatprep.subr.bf16.mxu0 0
    %1298 = vmatpush1.bf16.msra.mxu0 %v1290
    %1299 = vmatprep.subr.bf16.mxu0 0
    %1300 = vmatpush1.bf16.msra.mxu0 %v1291
    %1301 = vmatprep.subr.bf16.mxu0 0
    %1302 = vmatpush1.bf16.msra.mxu0 0
    %1303 = vmatprep.subr.bf16.mxu0 0
    %1304 = vmatpush1.bf16.msra.mxu0 0
    %1305 = vmatprep.subr.bf16.mxu0 0
    %1306 = vmatpush1.bf16.msra.mxu0 0
    %1307 = vmatprep.subr.bf16.mxu0 0
    %1308 = vmatpush1.bf16.msra.mxu0 0
    %1309 = vmatprep.subr.bf16.mxu0 0
    %1310 = vmatpush1.bf16.msra.mxu0 0
    %1311 = vmatprep.subr.bf16.mxu0 0
    %1312 = vmatpush1.bf16.msra.mxu0 0
    %1313 = vmatprep.subr.bf16.mxu0 0
    %1314 = vmatpush1.bf16.msra.mxu0 0
    %1315 = vmatprep.subr.bf16.mxu0 0
    %1316 = vmatpush1.bf16.msra.mxu0 0
    %1317 = vmatprep.subr.bf16.mxu0 0
    %1318 = vmatpush1.bf16.msra.mxu0 0
    %1319 = vmatprep.subr.bf16.mxu0 0
    %1320 = vmatpush1.bf16.msra.mxu0 0
    %1321 = vmatprep.subr.bf16.mxu0 0
    %1322 = vmatpush1.bf16.msra.mxu0 0
    %1323 = vmatprep.subr.bf16.mxu0 0
    %1324 = vmatpush1.bf16.msra.mxu0 0
    %1325 = vmatprep.subr.bf16.mxu0 0
    %1326 = vmatpush1.bf16.msra.mxu0 0
    %1327 = vmatprep.subr.bf16.mxu0 0
    %1328 = vmatpush1.bf16.msra.mxu0 0
    %1329 = vmatprep.mubr.bf16.mxu0 0
    %1330 = vmatmul.mubr.bf16.gmra.mrb[0].mxu0 %v1295
    %v1331 = vpop.f32.mrb[0].mxu0
    %v1332 = vadd.f32 %v1280, %v1331
    %v1333 = vpop.f32.mrb[0].mxu0
    %v1334 = vpop.f32.mrb[0].mxu0
    %v1335 = vadd.f32 %v1280, %v1334
    %v1336 = vpop.f32.mrb[0].mxu0
    %1337 = vdwg.mxu0
    %v1338 = vmax.f32 %v1332, 0.0
    %v1339 = vmax.f32 %v1335, 0.0
    %v1340 = vpack.c.bf16 %v1339, %v1338
    %v1341 = vld [vmem:[%s10] sm:$0xf]
    %v1342 = vld [vmem:[%s10 + $0x4] sm:$0xf]
    %v1343 = vld [vmem:[%s10 + $0x8] sm:$0xf]
    %v1344 = vld [vmem:[%s10 + $0xc] sm:$0xf]
    %v1345 = vld [vmem:[%s10 + $0x10] sm:$0xf]
    %v1346 = vld [vmem:[%s10 + $0x14] sm:$0xf]
    %v1347 = vld [vmem:[%s10 + $0x18] sm:$0xf]
    %v1348 = vld [vmem:[%s10 + $0x1c] sm:$0xf]
    %v1349 = vld [vmem:[%s11] sm:$0x1]
    %v1351 = vlaneseq
    %v1352 = vshrl.u32 %v1351, 7
    %v1353 = vsub.s32 0, %v1352
    %v1354 = vrot.slane %v1349, %v1353
    %v1364 = vunpack.c.l.b16 %v1341
    %v1365 = vunpack.c.l.b16 %v1342
    %v1366 = vunpack.c.l.b16 %v1343
    %v1367 = vunpack.c.l.b16 %v1344
    %v1368 = vunpack.c.l.b16 %v1345
    %v1369 = vunpack.c.l.b16 %v1346
    %v1370 = vunpack.c.l.b16 %v1347
    %v1371 = vunpack.c.l.b16 %v1348
    %v1372 = vpack.c.b16 %v1365, %v1364
    %v1373 = vpack.c.b16 %v1367, %v1366
    %v1374 = vpack.c.b16 %v1369, %v1368
    %v1375 = vpack.c.b16 %v1371, %v1370
    %vm1380 = vcmask 523264
    %v1382 = vsel %vm1380, %v1340, 0
    %1384 = vmatprep.subr.bf16.mxu0 0
    %1385 = vmatpush1.bf16.msra.mxu0 %v1372
    %1386 = vmatprep.subr.bf16.mxu0 0
    %1387 = vmatpush1.bf16.msra.mxu0 %v1373
    %1388 = vmatprep.subr.bf16.mxu0 0
    %1389 = vmatpush1.bf16.msra.mxu0 %v1374
    %1390 = vmatprep.subr.bf16.mxu0 0
    %1391 = vmatpush1.bf16.msra.mxu0 %v1375
    %1392 = vmatprep.subr.bf16.mxu0 0
    %1393 = vmatpush1.bf16.msra.mxu0 0
    %1394 = vmatprep.subr.bf16.mxu0 0
    %1395 = vmatpush1.bf16.msra.mxu0 0
    %1396 = vmatprep.subr.bf16.mxu0 0
    %1397 = vmatpush1.bf16.msra.mxu0 0
    %1398 = vmatprep.subr.bf16.mxu0 0
    %1399 = vmatpush1.bf16.msra.mxu0 0
    %1400 = vmatprep.subr.bf16.mxu0 0
    %1401 = vmatpush1.bf16.msra.mxu0 0
    %1402 = vmatprep.subr.bf16.mxu0 0
    %1403 = vmatpush1.bf16.msra.mxu0 0
    %1404 = vmatprep.subr.bf16.mxu0 0
    %1405 = vmatpush1.bf16.msra.mxu0 0
    %1406 = vmatprep.subr.bf16.mxu0 0
    %1407 = vmatpush1.bf16.msra.mxu0 0
    %1408 = vmatprep.subr.bf16.mxu0 0
    %1409 = vmatpush1.bf16.msra.mxu0 0
    %1410 = vmatprep.subr.bf16.mxu0 0
    %1411 = vmatpush1.bf16.msra.mxu0 0
    %1412 = vmatprep.subr.bf16.mxu0 0
    %1413 = vmatpush1.bf16.msra.mxu0 0
    %1414 = vmatprep.subr.bf16.mxu0 0
    %1415 = vmatpush1.bf16.msra.mxu0 0
    %1416 = vmatprep.mubr.bf16.mxu0 0
    %1417 = vmatmul.mubr.bf16.gmra.mrb[0].mxu0 %v1382
    %v1418 = vpop.f32.mrb[0].mxu0
    %v1419 = vadd.f32 %v1354, %v1418
    %v1420 = vpop.f32.mrb[0].mxu0
    %v1421 = vpop.f32.mrb[0].mxu0
    %v1422 = vadd.f32 %v1354, %v1421
    %v1423 = vpop.f32.mrb[0].mxu0
    %1424 = vdwg.mxu0
    %v1425 = vadd.f32 %v1268, %v1419
    %v1426 = vadd.f32 %v1269, %v1422
    %v1427 = vsel %vm127, %v1425, 0.0
    %1428 = vadd.xlane.f32.xlu0 %v1427
    %v1429 = vpop.xlane.xlu0 %1428
    %v1430 = vsel %vm127, %v1426, 0.0
    %1431 = vadd.xlane.f32.xlu0 %v1430
    %v1432 = vpop.xlane.xlu0 %1431
    %v1433 = vmul.f32 %v1429, %v1227
    %v1434 = vmul.f32 %v1432, %v1227
    %v1435 = vmul.f32 %v1425, %v1425
    %v1436 = vmul.f32 %v1426, %v1426
    %v1437 = vsel %vm127, %v1435, 0.0
    %1438 = vadd.xlane.f32.xlu0 %v1437
    %v1439 = vpop.xlane.xlu0 %1438
    %v1440 = vsel %vm127, %v1436, 0.0
    %1441 = vadd.xlane.f32.xlu0 %v1440
    %v1442 = vpop.xlane.xlu0 %1441
    %v1443 = vmul.f32 %v1439, %v1227
    %v1444 = vmul.f32 %v1442, %v1227
    %v1445 = vmul.f32 %v1433, %v1433
    %v1446 = vmul.f32 %v1434, %v1434
    %v1447 = vsub.f32 %v1443, %v1445
    %v1448 = vsub.f32 %v1444, %v1446
    %v1449 = vsub.f32 %v1425, %v1433
    %v1450 = vsub.f32 %v1426, %v1434
    %v1451 = vadd.f32 %v1447, 1e-05
    %v1452 = vadd.f32 %v1448, 1e-05
    %v1453 = vrsqrt.pop %v1451
    %v1454 = vrsqrt.pop %v1452
    %v1455 = vmul.f32 %v1449, %v1453
    %v1456 = vmul.f32 %v1450, %v1454
    %v1457 = vld [vmem:[%s14] sm:$0x1]
    %v1459 = vlaneseq
    %v1460 = vshrl.u32 %v1459, 7
    %v1461 = vsub.s32 0, %v1460
    %v1462 = vrot.slane %v1457, %v1461
    %v1464 = vmul.f32 %v1455, %v1462
    %v1465 = vmul.f32 %v1456, %v1462
    %v1466 = vld [vmem:[%s15] sm:$0x1]
    %v1468 = vlaneseq
    %v1469 = vshrl.u32 %v1468, 7
    %v1470 = vsub.s32 0, %v1469
    %v1471 = vrot.slane %v1466, %v1470
    %v1473 = vadd.f32 %v1464, %v1471
    %v1474 = vadd.f32 %v1465, %v1471
    %1475 = vst.msk [vmem:[#allocation8] sm:$0xff] %vm127, %v1473
    %1476 = vst.msk [vmem:[#allocation8 + $0x8] sm:$0xff] %vm127, %v1474
    // Predicated region
    $region78: #{tpu_custom_call.1} parent=1 // pred_check
      _
    $region79: #{tpu_custom_call.1} parent=1 // pred_check_branch
      %1478 = sbr.rel (0) target = $region81
    $region80: #{tpu_custom_call.1} parent=1 // pred_region
      %s1480 = ssub.s32 256, 256
      %1481 = vsyncadd [#allocation4], %s1480
      %s1482 = sshll.u32 [#allocation8], 4
      %s1483 = int_to_ptr.vmem [resolvable:$true] %s1482
      %1488 = dma.vmem_to_hbm [thread:$0]  %s1483, 256, %s16, [#allocation4], 128, 128, 8
    $region81: #{tpu_custom_call.1} parent=1 // pred_fallthru
      _
    // Predicated region
    $region82: #{tpu_custom_call.1} parent=1 // pred_check
      _
    $region83: #{tpu_custom_call.1} parent=1 // pred_check_branch
      %1490 = sbr.rel (0) target = $region85
    $region84: #{tpu_custom_call.1} parent=1 // pred_region
      %1491 = dma.done [#allocation4], 256
    $region85: #{tpu_custom_call.1} parent=1 // pred_fallthru
      _
    %1492 = vsyncpa [#allocation3], 1
    %1493 = vsyncpa [#allocation6], 1
    %1494 = vsyncpa [#allocation4], 1

</llo_original>
